<compile_context>
chip_gen: v7x
topology: tpu7x:2x2x1
jax: 0.10.0
libtpu: 0.0.40
codegen_flags: <defaults>
</compile_context>

<pallas_src>
import jax
import jax.numpy as jnp
from jax.experimental import pallas as pl
from jax.experimental.pallas import tpu as pltpu


_VMEM_LIMIT = 32 * 1024 * 1024   # within the scoped-VMEM envelope on v5e/v6e/v7x


# ----------------------------- Pallas kernels ------------------------------ #

def _conv_bias_lrelu_kernel(w_ref, p_ref, b_ref, o_ref):
    # (Cout, K) @ (K, TILE_M) + bias + LeakyReLU(0.2); lane-dense (Cout, TILE_M) out.
    acc = jnp.dot(w_ref[...], p_ref[...], preferred_element_type=jnp.float32)
    y = acc + b_ref[...]                       # (Cout, 1) broadcasts over lanes
    o_ref[...] = jnp.where(y > 0, y, 0.2 * y).astype(o_ref.dtype)


def _conv_stats_kernel(w_ref, p_ref, o_ref, stats_ref):
    # Conv matmul tile + per-tile per-channel sum / sum-of-squares partials
    # (one-pass variance; BN stats must span the full M axis, finished in glue).
    acc = jnp.dot(w_ref[...], p_ref[...], preferred_element_type=jnp.float32)
    o_ref[...] = acc                                        # f32 conv output tile
    s1 = jnp.sum(acc, axis=1, keepdims=True)                # (Cout, 1)
    s2 = jnp.sum(acc * acc, axis=1, keepdims=True)          # (Cout, 1)
    cout = acc.shape[0]
    lane = jax.lax.broadcasted_iota(jnp.int32, (cout, 128), 1)
    stats = jnp.where(lane == 0, s1, jnp.where(lane == 1, s2, 0.0))
    stats_ref[...] = stats[None, :, :]                      # (1, Cout, 128)


def _bn_lrelu_kernel(x_ref, scale_ref, shift_ref, o_ref):
    # y = x * scale + shift (per-channel), then LeakyReLU(0.2).
    y = x_ref[...] * scale_ref[...] + shift_ref[...]
    o_ref[...] = jnp.where(y > 0, y, 0.2 * y).astype(o_ref.dtype)


# ------------------------------- JAX glue ---------------------------------- #

def _choose_tile_m(m):
    for t in (1024, 512, 256, 128):
        if m % t == 0:
            return m // t, t
    return 1, m                               # small / irregular M: single block


def _im2col_T(x_cnhw, k, stride, pad):
    """(C, N, H, W) -> transposed patches (C*k*k, N*Ho*Wo); K-order = (C, kh, kw)."""
    c, n, h, w = x_cnhw.shape
    xp = jnp.pad(x_cnhw, ((0, 0), (0, 0), (pad, pad), (pad, pad)))
    ho = (h + 2 * pad - k) // stride + 1
    wo = (w + 2 * pad - k) // stride + 1
    cols = []
    for i in range(k):
        for j in range(k):
            cols.append(xp[:, :, i:i + stride * ho:stride,
                           j:j + stride * wo:stride])
    p = jnp.stack(cols, axis=1)               # (C, k*k, N, Ho, Wo)
    return p.reshape(c * k * k, n * ho * wo), (n, ho, wo)


def _compiler_params():
    return pltpu.CompilerParams(dimension_semantics=("parallel",),
                                vmem_limit_bytes=_VMEM_LIMIT)


def conv_bias_lrelu(x_cnhw, wmat, bias, *, stride, pad, out_dtype=jnp.bfloat16):
    cout, kdim = wmat.shape
    p_t, (n, ho, wo) = _im2col_T(x_cnhw, 4, stride, pad)
    m = p_t.shape[1]
    g, tm = _choose_tile_m(m)
    out = pl.pallas_call(
        _conv_bias_lrelu_kernel,
        out_shape=jax.ShapeDtypeStruct((cout, m), out_dtype),
        grid=(g,),
        in_specs=[pl.BlockSpec((cout, kdim), lambda i: (0, 0)),
                  pl.BlockSpec((kdim, tm), lambda i: (0, i)),
                  pl.BlockSpec((cout, 1), lambda i: (0, 0))],
        out_specs=pl.BlockSpec((cout, tm), lambda i: (0, i)),
        compiler_params=_compiler_params(),
    )(wmat.astype(jnp.bfloat16), p_t.astype(jnp.bfloat16),
      bias.reshape(cout, 1).astype(jnp.float32))
    return out.reshape(cout, n, ho, wo)


def conv_bn_lrelu(x_cnhw, wmat, gamma, beta, *, stride, pad, eps=1e-5,
                  out_dtype=jnp.bfloat16):
    cout, kdim = wmat.shape
    p_t, (n, ho, wo) = _im2col_T(x_cnhw, 4, stride, pad)
    m = p_t.shape[1]
    g, tm = _choose_tile_m(m)

    # Pass 1: conv matmul + per-tile sum / sumsq partials.
    conv, stats = pl.pallas_call(
        _conv_stats_kernel,
        out_shape=(jax.ShapeDtypeStruct((cout, m), jnp.float32),
                   jax.ShapeDtypeStruct((g, cout, 128), jnp.float32)),
        grid=(g,),
        in_specs=[pl.BlockSpec((cout, kdim), lambda i: (0, 0)),
                  pl.BlockSpec((kdim, tm), lambda i: (0, i))],
        out_specs=(pl.BlockSpec((cout, tm), lambda i: (0, i)),
                   pl.BlockSpec((1, cout, 128), lambda i: (i, 0, 0))),
        compiler_params=_compiler_params(),
    )(wmat.astype(jnp.bfloat16), p_t.astype(jnp.bfloat16))

    # Global (full-M) batch statistics — tiny XLA reduction over the partials.
    s1 = jnp.sum(stats[:, :, 0], axis=0)
    s2 = jnp.sum(stats[:, :, 1], axis=0)
    mean = s1 / m
    var = jnp.maximum(s2 / m - mean * mean, 0.0)   # biased var == PyTorch training mode
    inv = jax.lax.rsqrt(var + eps)
    scale = (gamma * inv).reshape(cout, 1)
    shift = (beta - mean * gamma * inv).reshape(cout, 1)

    # Pass 2: normalize + affine + LeakyReLU, tiled over M (mem-bound elementwise).
    out = pl.pallas_call(
        _bn_lrelu_kernel,
        out_shape=jax.ShapeDtypeStruct((cout, m), out_dtype),
        grid=(g,),
        in_specs=[pl.BlockSpec((cout, tm), lambda i: (0, i)),
                  pl.BlockSpec((cout, 1), lambda i: (0, 0)),
                  pl.BlockSpec((cout, 1), lambda i: (0, 0))],
        out_specs=pl.BlockSpec((cout, tm), lambda i: (0, i)),
        compiler_params=_compiler_params(),
    )(conv, scale, shift)
    return out.reshape(cout, n, ho, wo)


def conv_sigmoid_final(x_cnhw, wmat, bias):
    # Final Conv2d(8*fd -> 1, k=4, s=2, p=0) + Sigmoid.  Cout=1 and M=N: below one
    # vreg / MXU tile, so a Pallas call is pure overhead (per review) -> plain XLA.
    p_t, (n, ho, wo) = _im2col_T(x_cnhw, 4, 2, 0)
    y = wmat.astype(jnp.float32) @ p_t.astype(jnp.float32) + bias.reshape(1, 1)
    y = jax.nn.sigmoid(y)
    return y.reshape(1, n, ho, wo).transpose(1, 0, 2, 3)     # NCHW output


# --------------------------- Discriminator model --------------------------- #

def init_discriminator_params(key, img_channels, features_d):
    fd = features_d
    ks = jax.random.split(key, 7)

    def conv_w(k, cout, cin):
        # Stored pre-reshaped to matmul layout (Cout, Cin*kh*kw); K-order (Cin, kh, kw)
        # matches the im2col patch layout, so no per-forward transpose is needed.
        w = 0.02 * jax.random.normal(k, (cout, cin, 4, 4), jnp.float32)
        return w.reshape(cout, cin * 16)

    return {
        # layer 1: Conv2d(img_channels, fd) + LeakyReLU
        "w1": conv_w(ks[0], fd, img_channels),
        "b1": 0.01 * jax.random.normal(ks[5], (fd,), jnp.float32),
        # block 2: Conv(fd, 2fd, bias=False) + BN + LeakyReLU
        "w2": conv_w(ks[1], fd * 2, fd),
        "g2": jnp.ones((fd * 2,), jnp.float32),
        "be2": jnp.zeros((fd * 2,), jnp.float32),
        # block 3
        "w3": conv_w(ks[2], fd * 4, fd * 2),
        "g3": jnp.ones((fd * 4,), jnp.float32),
        "be3": jnp.zeros((fd * 4,), jnp.float32),
        # block 4
        "w4": conv_w(ks[3], fd * 8, fd * 4),
        "g4": jnp.ones((fd * 8,), jnp.float32),
        "be4": jnp.zeros((fd * 8,), jnp.float32),
        # layer 5: Conv2d(8fd, 1, k=4, s=2, p=0) + Sigmoid
        "w5": conv_w(ks[4], 1, fd * 8),
        "b5": 0.01 * jax.random.normal(ks[6], (1,), jnp.float32),
    }


@jax.jit
def discriminator_forward(params, x):
    a = x.transpose(1, 0, 2, 3)   # NCHW -> internal CNHW (single boundary transpose)
    a = conv_bias_lrelu(a, params["w1"], params["b1"], stride=2, pad=1)
    a = conv_bn_lrelu(a, params["w2"], params["g2"], params["be2"], stride=2, pad=1)
    a = conv_bn_lrelu(a, params["w3"], params["g3"], params["be3"], stride=2, pad=1)
    a = conv_bn_lrelu(a, params["w4"], params["g4"], params["be4"], stride=2, pad=1)
    return conv_sigmoid_final(a, params["w5"], params["b5"])   # (N, 1, 1, 1)


# ----------------------------------- main ----------------------------------- #

if __name__ == "__main__":
    key = jax.random.PRNGKey(0)
    k_param, k_input = jax.random.split(key)

    # DCGAN discriminator (4 stride-2 convs p=1 then k=4/s=2/p=0) needs 64x64
    # spatial input to reach a 1x1 output.
    batch, img_channels, features_d, spatial = 2, 3, 8, 64
    x = jax.random.normal(k_input, (batch, img_channels, spatial, spatial),
                          jnp.float32)

    params = init_discriminator_params(k_param, img_channels, features_d)
    out = discriminator_forward(params, x)
    out = jax.block_until_ready(out)

    assert out.shape == (batch, 1, 1, 1), out.shape
    assert bool(jnp.all(jnp.isfinite(out)))
    assert bool(jnp.all((out >= 0.0) & (out <= 1.0)))  # sigmoid output range
    print("KERNEL_OK")
</pallas_src>

<mosaic_0001>
module attributes {stable_mosaic.version = 11 : i64} {
  func.func @_conv_bias_lrelu_kernel(%arg0: i32, %arg1: memref<8x48xbf16, #tpu.memory_space<vmem>>, %arg2: memref<48x1024xbf16, #tpu.memory_space<vmem>>, %arg3: memref<8x1xf32, #tpu.memory_space<vmem>>, %arg4: memref<8x1024xbf16, #tpu.memory_space<vmem>>) attributes {dimension_semantics = [#tpu.dimension_semantics<parallel>], iteration_bounds = array<i64: 2>, scalar_prefetch = 0 : i64, scratch_operands = 0 : i64, tpu.core_type = #tpu.core_type<tc>, window_params = [{pipeline_mode = #tpu.pipeline_mode<synchronous>, transform_indices = @transform_0, window_bounds = array<i64: 8, 48>}, {transform_indices = @transform_1, window_bounds = array<i64: 48, 1024>}, {pipeline_mode = #tpu.pipeline_mode<synchronous>, transform_indices = @transform_2, window_bounds = array<i64: 8, 1>}, {transform_indices = @transform_3, window_bounds = array<i64: 8, 1024>}]} {
    %c0 = arith.constant 0 : index
    %c0_0 = arith.constant 0 : index
    %0 = vector.load %arg1[%c0, %c0_0] : memref<8x48xbf16, #tpu.memory_space<vmem>>, vector<8x48xbf16>
    %c0_1 = arith.constant 0 : index
    %c0_2 = arith.constant 0 : index
    %1 = vector.load %arg2[%c0_1, %c0_2] : memref<48x1024xbf16, #tpu.memory_space<vmem>>, vector<48x1024xbf16>
    %cst = arith.constant dense<0.000000e+00> : vector<8x1024xf32>
    %2 = tpu.matmul %0, %1, %cst {dimension_numbers = #tpu.dot_dimension_numbers<[1], [0], [0], [1], [0, 0, 1, 1], [], []>} : vector<8x48xbf16>, vector<48x1024xbf16>, vector<8x1024xf32> -> vector<8x1024xf32>
    %c0_3 = arith.constant 0 : index
    %c0_4 = arith.constant 0 : index
    %3 = vector.load %arg3[%c0_3, %c0_4] : memref<8x1xf32, #tpu.memory_space<vmem>>, vector<8x1xf32>
    %4 = vector.broadcast %3 : vector<8x1xf32> to vector<8x1024xf32>
    %5 = arith.addf %2, %4 : vector<8x1024xf32>
    %cst_5 = arith.constant 0.000000e+00 : f32
    %6 = vector.broadcast %cst_5 : f32 to vector<8x1024xf32>
    %7 = arith.cmpf ogt, %5, %6 : vector<8x1024xf32>
    %cst_6 = arith.constant 2.000000e-01 : f32
    %8 = vector.broadcast %cst_6 : f32 to vector<8x1024xf32>
    %9 = arith.mulf %8, %5 : vector<8x1024xf32>
    %10 = arith.select %7, %5, %9 : vector<8x1024xi1>, vector<8x1024xf32>
    %11 = arith.truncf %10 : vector<8x1024xf32> to vector<8x1024xbf16>
    %c0_7 = arith.constant 0 : index
    %c0_8 = arith.constant 0 : index
    %12 = vector.load %arg4[%c0_7, %c0_8] : memref<8x1024xbf16, #tpu.memory_space<vmem>>, vector<8x1024xbf16>
    tpu.vector_store %arg4[%c0_7, %c0_8], %11 {strides = array<i32>} : memref<8x1024xbf16, #tpu.memory_space<vmem>>, vector<8x1024xbf16>,
    return
  }
  func.func @transform_0(%arg0: i32) -> (i32, i32) {
    %c0_i32 = arith.constant 0 : i32
    %c0_i32_0 = arith.constant 0 : i32
    %c0_i32_1 = arith.constant 0 : i32
    return %c0_i32, %c0_i32_0 : i32, i32
  }
  func.func @transform_1(%arg0: i32) -> (i32, i32) {
    %c0_i32 = arith.constant 0 : i32
    %c0_i32_0 = arith.constant 0 : i32
    return %c0_i32, %arg0 : i32, i32
  }
  func.func @transform_2(%arg0: i32) -> (i32, i32) {
    %c0_i32 = arith.constant 0 : i32
    %c0_i32_0 = arith.constant 0 : i32
    %c0_i32_1 = arith.constant 0 : i32
    return %c0_i32, %c0_i32_0 : i32, i32
  }
  func.func @transform_3(%arg0: i32) -> (i32, i32) {
    %c0_i32 = arith.constant 0 : i32
    %c0_i32_0 = arith.constant 0 : i32
    return %c0_i32, %arg0 : i32, i32
  }
}

module attributes {stable_mosaic.version = 11 : i64} {
  func.func @_conv_stats_kernel(%arg0: i32, %arg1: memref<16x128xbf16, #tpu.memory_space<vmem>>, %arg2: memref<128x512xbf16, #tpu.memory_space<vmem>>, %arg3: memref<16x512xf32, #tpu.memory_space<vmem>>, %arg4: memref<1x16x128xf32, #tpu.memory_space<vmem>>) attributes {dimension_semantics = [#tpu.dimension_semantics<parallel>], iteration_bounds = array<i64: 1>, scalar_prefetch = 0 : i64, scratch_operands = 0 : i64, tpu.core_type = #tpu.core_type<tc>, window_params = [{pipeline_mode = #tpu.pipeline_mode<synchronous>, transform_indices = @transform_0, window_bounds = array<i64: 16, 128>}, {transform_indices = @transform_1, window_bounds = array<i64: 128, 512>}, {transform_indices = @transform_2, window_bounds = array<i64: 16, 512>}, {transform_indices = @transform_3, window_bounds = array<i64: 1, 16, 128>}]} {
    %c0 = arith.constant 0 : index
    %c0_0 = arith.constant 0 : index
    %0 = vector.load %arg1[%c0, %c0_0] : memref<16x128xbf16, #tpu.memory_space<vmem>>, vector<16x128xbf16>
    %c0_1 = arith.constant 0 : index
    %c0_2 = arith.constant 0 : index
    %1 = vector.load %arg2[%c0_1, %c0_2] : memref<128x512xbf16, #tpu.memory_space<vmem>>, vector<128x512xbf16>
    %cst = arith.constant dense<0.000000e+00> : vector<16x512xf32>
    %2 = tpu.matmul %0, %1, %cst {dimension_numbers = #tpu.dot_dimension_numbers<[1], [0], [0], [1], [0, 0, 1, 1], [], []>} : vector<16x128xbf16>, vector<128x512xbf16>, vector<16x512xf32> -> vector<16x512xf32>
    %c0_3 = arith.constant 0 : index
    %c0_4 = arith.constant 0 : index
    %3 = vector.load %arg3[%c0_3, %c0_4] : memref<16x512xf32, #tpu.memory_space<vmem>>, vector<16x512xf32>
    tpu.vector_store %arg3[%c0_3, %c0_4], %2 {strides = array<i32>} : memref<16x512xf32, #tpu.memory_space<vmem>>, vector<16x512xf32>,
    %cst_5 = arith.constant dense<0.000000e+00> : vector<16xf32>
    %4 = vector.multi_reduction <add>, %2, %cst_5 [1] : vector<16x512xf32> to vector<16xf32>
    %5 = vector.shape_cast %4 : vector<16xf32> to vector<16x1xf32>
    %6 = arith.mulf %2, %2 : vector<16x512xf32>
    %cst_6 = arith.constant dense<0.000000e+00> : vector<16xf32>
    %7 = vector.multi_reduction <add>, %6, %cst_6 [1] : vector<16x512xf32> to vector<16xf32>
    %8 = vector.shape_cast %7 : vector<16xf32> to vector<16x1xf32>
    %9 = tpu.iota {dimensions = array<i32: 1>} : vector<16x128xi32>
    %c0_i32 = arith.constant 0 : i32
    %10 = vector.broadcast %c0_i32 : i32 to vector<16x128xi32>
    %11 = arith.cmpi eq, %9, %10 : vector<16x128xi32>
    %c1_i32 = arith.constant 1 : i32
    %12 = vector.broadcast %c1_i32 : i32 to vector<16x128xi32>
    %13 = arith.cmpi eq, %9, %12 : vector<16x128xi32>
    %cst_7 = arith.constant 0.000000e+00 : f32
    %14 = vector.shape_cast %8 : vector<16x1xf32> to vector<16x1xf32>
    %15 = vector.broadcast %14 : vector<16x1xf32> to vector<16x128xf32>
    %16 = vector.broadcast %cst_7 : f32 to vector<16x128xf32>
    %17 = arith.select %13, %15, %16 : vector<16x128xi1>, vector<16x128xf32>
    %18 = vector.shape_cast %5 : vector<16x1xf32> to vector<16x1xf32>
    %19 = vector.broadcast %18 : vector<16x1xf32> to vector<16x128xf32>
    %20 = arith.select %11, %19, %17 : vector<16x128xi1>, vector<16x128xf32>
    %21 = vector.shape_cast %20 : vector<16x128xf32> to vector<1x16x128xf32>
    %c0_8 = arith.constant 0 : index
    %c0_9 = arith.constant 0 : index
    %c0_10 = arith.constant 0 : index
    %22 = vector.load %arg4[%c0_8, %c0_9, %c0_10] : memref<1x16x128xf32, #tpu.memory_space<vmem>>, vector<1x16x128xf32>
    tpu.vector_store %arg4[%c0_8, %c0_9, %c0_10], %21 {strides = array<i32>} : memref<1x16x128xf32, #tpu.memory_space<vmem>>, vector<1x16x128xf32>,
    return
  }
  func.func @transform_0(%arg0: i32) -> (i32, i32) {
    %c0_i32 = arith.constant 0 : i32
    %c0_i32_0 = arith.constant 0 : i32
    %c0_i32_1 = arith.constant 0 : i32
    return %c0_i32, %c0_i32_0 : i32, i32
  }
  func.func @transform_1(%arg0: i32) -> (i32, i32) {
    %c0_i32 = arith.constant 0 : i32
    %c0_i32_0 = arith.constant 0 : i32
    return %c0_i32, %arg0 : i32, i32
  }
  func.func @transform_2(%arg0: i32) -> (i32, i32) {
    %c0_i32 = arith.constant 0 : i32
    %c0_i32_0 = arith.constant 0 : i32
    return %c0_i32, %arg0 : i32, i32
  }
  func.func @transform_3(%arg0: i32) -> (i32, i32, i32) {
    %c0_i32 = arith.constant 0 : i32
    %c0_i32_0 = arith.constant 0 : i32
    %c0_i32_1 = arith.constant 0 : i32
    return %arg0, %c0_i32, %c0_i32_0 : i32, i32, i32
  }
}

module attributes {stable_mosaic.version = 11 : i64} {
  func.func @_bn_lrelu_kernel(%arg0: i32, %arg1: memref<16x512xf32, #tpu.memory_space<vmem>>, %arg2: memref<16x1xf32, #tpu.memory_space<vmem>>, %arg3: memref<16x1xf32, #tpu.memory_space<vmem>>, %arg4: memref<16x512xbf16, #tpu.memory_space<vmem>>) attributes {dimension_semantics = [#tpu.dimension_semantics<parallel>], iteration_bounds = array<i64: 1>, scalar_prefetch = 0 : i64, scratch_operands = 0 : i64, tpu.core_type = #tpu.core_type<tc>, window_params = [{transform_indices = @transform_0, window_bounds = array<i64: 16, 512>}, {pipeline_mode = #tpu.pipeline_mode<synchronous>, transform_indices = @transform_1, window_bounds = array<i64: 16, 1>}, {pipeline_mode = #tpu.pipeline_mode<synchronous>, transform_indices = @transform_2, window_bounds = array<i64: 16, 1>}, {transform_indices = @transform_3, window_bounds = array<i64: 16, 512>}]} {
    %c0 = arith.constant 0 : index
    %c0_0 = arith.constant 0 : index
    %0 = vector.load %arg1[%c0, %c0_0] : memref<16x512xf32, #tpu.memory_space<vmem>>, vector<16x512xf32>
    %c0_1 = arith.constant 0 : index
    %c0_2 = arith.constant 0 : index
    %1 = vector.load %arg2[%c0_1, %c0_2] : memref<16x1xf32, #tpu.memory_space<vmem>>, vector<16x1xf32>
    %2 = vector.broadcast %1 : vector<16x1xf32> to vector<16x512xf32>
    %3 = arith.mulf %0, %2 : vector<16x512xf32>
    %c0_3 = arith.constant 0 : index
    %c0_4 = arith.constant 0 : index
    %4 = vector.load %arg3[%c0_3, %c0_4] : memref<16x1xf32, #tpu.memory_space<vmem>>, vector<16x1xf32>
    %5 = vector.broadcast %4 : vector<16x1xf32> to vector<16x512xf32>
    %6 = arith.addf %3, %5 : vector<16x512xf32>
    %cst = arith.constant 0.000000e+00 : f32
    %7 = vector.broadcast %cst : f32 to vector<16x512xf32>
    %8 = arith.cmpf ogt, %6, %7 : vector<16x512xf32>
    %cst_5 = arith.constant 2.000000e-01 : f32
    %9 = vector.broadcast %cst_5 : f32 to vector<16x512xf32>
    %10 = arith.mulf %9, %6 : vector<16x512xf32>
    %11 = arith.select %8, %6, %10 : vector<16x512xi1>, vector<16x512xf32>
    %12 = arith.truncf %11 : vector<16x512xf32> to vector<16x512xbf16>
    %c0_6 = arith.constant 0 : index
    %c0_7 = arith.constant 0 : index
    %13 = vector.load %arg4[%c0_6, %c0_7] : memref<16x512xbf16, #tpu.memory_space<vmem>>, vector<16x512xbf16>
    tpu.vector_store %arg4[%c0_6, %c0_7], %12 {strides = array<i32>} : memref<16x512xbf16, #tpu.memory_space<vmem>>, vector<16x512xbf16>,
    return
  }
  func.func @transform_0(%arg0: i32) -> (i32, i32) {
    %c0_i32 = arith.constant 0 : i32
    %c0_i32_0 = arith.constant 0 : i32
    return %c0_i32, %arg0 : i32, i32
  }
  func.func @transform_1(%arg0: i32) -> (i32, i32) {
    %c0_i32 = arith.constant 0 : i32
    %c0_i32_0 = arith.constant 0 : i32
    %c0_i32_1 = arith.constant 0 : i32
    return %c0_i32, %c0_i32_0 : i32, i32
  }
  func.func @transform_2(%arg0: i32) -> (i32, i32) {
    %c0_i32 = arith.constant 0 : i32
    %c0_i32_0 = arith.constant 0 : i32
    %c0_i32_1 = arith.constant 0 : i32
    return %c0_i32, %c0_i32_0 : i32, i32
  }
  func.func @transform_3(%arg0: i32) -> (i32, i32) {
    %c0_i32 = arith.constant 0 : i32
    %c0_i32_0 = arith.constant 0 : i32
    return %c0_i32, %arg0 : i32, i32
  }
}

module attributes {stable_mosaic.version = 11 : i64} {
  func.func @_conv_stats_kernel(%arg0: i32, %arg1: memref<32x256xbf16, #tpu.memory_space<vmem>>, %arg2: memref<256x128xbf16, #tpu.memory_space<vmem>>, %arg3: memref<32x128xf32, #tpu.memory_space<vmem>>, %arg4: memref<1x32x128xf32, #tpu.memory_space<vmem>>) attributes {dimension_semantics = [#tpu.dimension_semantics<parallel>], iteration_bounds = array<i64: 1>, scalar_prefetch = 0 : i64, scratch_operands = 0 : i64, tpu.core_type = #tpu.core_type<tc>, window_params = [{pipeline_mode = #tpu.pipeline_mode<synchronous>, transform_indices = @transform_0, window_bounds = array<i64: 32, 256>}, {transform_indices = @transform_1, window_bounds = array<i64: 256, 128>}, {transform_indices = @transform_2, window_bounds = array<i64: 32, 128>}, {transform_indices = @transform_3, window_bounds = array<i64: 1, 32, 128>}]} {
    %c0 = arith.constant 0 : index
    %c0_0 = arith.constant 0 : index
    %0 = vector.load %arg1[%c0, %c0_0] : memref<32x256xbf16, #tpu.memory_space<vmem>>, vector<32x256xbf16>
    %c0_1 = arith.constant 0 : index
    %c0_2 = arith.constant 0 : index
    %1 = vector.load %arg2[%c0_1, %c0_2] : memref<256x128xbf16, #tpu.memory_space<vmem>>, vector<256x128xbf16>
    %cst = arith.constant dense<0.000000e+00> : vector<32x128xf32>
    %2 = tpu.matmul %0, %1, %cst {dimension_numbers = #tpu.dot_dimension_numbers<[1], [0], [0], [1], [0, 0, 1, 1], [], []>} : vector<32x256xbf16>, vector<256x128xbf16>, vector<32x128xf32> -> vector<32x128xf32>
    %c0_3 = arith.constant 0 : index
    %c0_4 = arith.constant 0 : index
    %3 = vector.load %arg3[%c0_3, %c0_4] : memref<32x128xf32, #tpu.memory_space<vmem>>, vector<32x128xf32>
    tpu.vector_store %arg3[%c0_3, %c0_4], %2 {strides = array<i32>} : memref<32x128xf32, #tpu.memory_space<vmem>>, vector<32x128xf32>,
    %cst_5 = arith.constant dense<0.000000e+00> : vector<32xf32>
    %4 = vector.multi_reduction <add>, %2, %cst_5 [1] : vector<32x128xf32> to vector<32xf32>
    %5 = vector.shape_cast %4 : vector<32xf32> to vector<32x1xf32>
    %6 = arith.mulf %2, %2 : vector<32x128xf32>
    %cst_6 = arith.constant dense<0.000000e+00> : vector<32xf32>
    %7 = vector.multi_reduction <add>, %6, %cst_6 [1] : vector<32x128xf32> to vector<32xf32>
    %8 = vector.shape_cast %7 : vector<32xf32> to vector<32x1xf32>
    %9 = tpu.iota {dimensions = array<i32: 1>} : vector<32x128xi32>
    %c0_i32 = arith.constant 0 : i32
    %10 = vector.broadcast %c0_i32 : i32 to vector<32x128xi32>
    %11 = arith.cmpi eq, %9, %10 : vector<32x128xi32>
    %c1_i32 = arith.constant 1 : i32
    %12 = vector.broadcast %c1_i32 : i32 to vector<32x128xi32>
    %13 = arith.cmpi eq, %9, %12 : vector<32x128xi32>
    %cst_7 = arith.constant 0.000000e+00 : f32
    %14 = vector.shape_cast %8 : vector<32x1xf32> to vector<32x1xf32>
    %15 = vector.broadcast %14 : vector<32x1xf32> to vector<32x128xf32>
    %16 = vector.broadcast %cst_7 : f32 to vector<32x128xf32>
    %17 = arith.select %13, %15, %16 : vector<32x128xi1>, vector<32x128xf32>
    %18 = vector.shape_cast %5 : vector<32x1xf32> to vector<32x1xf32>
    %19 = vector.broadcast %18 : vector<32x1xf32> to vector<32x128xf32>
    %20 = arith.select %11, %19, %17 : vector<32x128xi1>, vector<32x128xf32>
    %21 = vector.shape_cast %20 : vector<32x128xf32> to vector<1x32x128xf32>
    %c0_8 = arith.constant 0 : index
    %c0_9 = arith.constant 0 : index
    %c0_10 = arith.constant 0 : index
    %22 = vector.load %arg4[%c0_8, %c0_9, %c0_10] : memref<1x32x128xf32, #tpu.memory_space<vmem>>, vector<1x32x128xf32>
    tpu.vector_store %arg4[%c0_8, %c0_9, %c0_10], %21 {strides = array<i32>} : memref<1x32x128xf32, #tpu.memory_space<vmem>>, vector<1x32x128xf32>,
    return
  }
  func.func @transform_0(%arg0: i32) -> (i32, i32) {
    %c0_i32 = arith.constant 0 : i32
    %c0_i32_0 = arith.constant 0 : i32
    %c0_i32_1 = arith.constant 0 : i32
    return %c0_i32, %c0_i32_0 : i32, i32
  }
  func.func @transform_1(%arg0: i32) -> (i32, i32) {
    %c0_i32 = arith.constant 0 : i32
    %c0_i32_0 = arith.constant 0 : i32
    return %c0_i32, %arg0 : i32, i32
  }
  func.func @transform_2(%arg0: i32) -> (i32, i32) {
    %c0_i32 = arith.constant 0 : i32
    %c0_i32_0 = arith.constant 0 : i32
    return %c0_i32, %arg0 : i32, i32
  }
  func.func @transform_3(%arg0: i32) -> (i32, i32, i32) {
    %c0_i32 = arith.constant 0 : i32
    %c0_i32_0 = arith.constant 0 : i32
    %c0_i32_1 = arith.constant 0 : i32
    return %arg0, %c0_i32, %c0_i32_0 : i32, i32, i32
  }
}

module attributes {stable_mosaic.version = 11 : i64} {
  func.func @_bn_lrelu_kernel(%arg0: i32, %arg1: memref<32x128xf32, #tpu.memory_space<vmem>>, %arg2: memref<32x1xf32, #tpu.memory_space<vmem>>, %arg3: memref<32x1xf32, #tpu.memory_space<vmem>>, %arg4: memref<32x128xbf16, #tpu.memory_space<vmem>>) attributes {dimension_semantics = [#tpu.dimension_semantics<parallel>], iteration_bounds = array<i64: 1>, scalar_prefetch = 0 : i64, scratch_operands = 0 : i64, tpu.core_type = #tpu.core_type<tc>, window_params = [{transform_indices = @transform_0, window_bounds = array<i64: 32, 128>}, {pipeline_mode = #tpu.pipeline_mode<synchronous>, transform_indices = @transform_1, window_bounds = array<i64: 32, 1>}, {pipeline_mode = #tpu.pipeline_mode<synchronous>, transform_indices = @transform_2, window_bounds = array<i64: 32, 1>}, {transform_indices = @transform_3, window_bounds = array<i64: 32, 128>}]} {
    %c0 = arith.constant 0 : index
    %c0_0 = arith.constant 0 : index
    %0 = vector.load %arg1[%c0, %c0_0] : memref<32x128xf32, #tpu.memory_space<vmem>>, vector<32x128xf32>
    %c0_1 = arith.constant 0 : index
    %c0_2 = arith.constant 0 : index
    %1 = vector.load %arg2[%c0_1, %c0_2] : memref<32x1xf32, #tpu.memory_space<vmem>>, vector<32x1xf32>
    %2 = vector.broadcast %1 : vector<32x1xf32> to vector<32x128xf32>
    %3 = arith.mulf %0, %2 : vector<32x128xf32>
    %c0_3 = arith.constant 0 : index
    %c0_4 = arith.constant 0 : index
    %4 = vector.load %arg3[%c0_3, %c0_4] : memref<32x1xf32, #tpu.memory_space<vmem>>, vector<32x1xf32>
    %5 = vector.broadcast %4 : vector<32x1xf32> to vector<32x128xf32>
    %6 = arith.addf %3, %5 : vector<32x128xf32>
    %cst = arith.constant 0.000000e+00 : f32
    %7 = vector.broadcast %cst : f32 to vector<32x128xf32>
    %8 = arith.cmpf ogt, %6, %7 : vector<32x128xf32>
    %cst_5 = arith.constant 2.000000e-01 : f32
    %9 = vector.broadcast %cst_5 : f32 to vector<32x128xf32>
    %10 = arith.mulf %9, %6 : vector<32x128xf32>
    %11 = arith.select %8, %6, %10 : vector<32x128xi1>, vector<32x128xf32>
    %12 = arith.truncf %11 : vector<32x128xf32> to vector<32x128xbf16>
    %c0_6 = arith.constant 0 : index
    %c0_7 = arith.constant 0 : index
    %13 = vector.load %arg4[%c0_6, %c0_7] : memref<32x128xbf16, #tpu.memory_space<vmem>>, vector<32x128xbf16>
    tpu.vector_store %arg4[%c0_6, %c0_7], %12 {strides = array<i32>} : memref<32x128xbf16, #tpu.memory_space<vmem>>, vector<32x128xbf16>,
    return
  }
  func.func @transform_0(%arg0: i32) -> (i32, i32) {
    %c0_i32 = arith.constant 0 : i32
    %c0_i32_0 = arith.constant 0 : i32
    return %c0_i32, %arg0 : i32, i32
  }
  func.func @transform_1(%arg0: i32) -> (i32, i32) {
    %c0_i32 = arith.constant 0 : i32
    %c0_i32_0 = arith.constant 0 : i32
    %c0_i32_1 = arith.constant 0 : i32
    return %c0_i32, %c0_i32_0 : i32, i32
  }
  func.func @transform_2(%arg0: i32) -> (i32, i32) {
    %c0_i32 = arith.constant 0 : i32
    %c0_i32_0 = arith.constant 0 : i32
    %c0_i32_1 = arith.constant 0 : i32
    return %c0_i32, %c0_i32_0 : i32, i32
  }
  func.func @transform_3(%arg0: i32) -> (i32, i32) {
    %c0_i32 = arith.constant 0 : i32
    %c0_i32_0 = arith.constant 0 : i32
    return %c0_i32, %arg0 : i32, i32
  }
}

module attributes {stable_mosaic.version = 11 : i64} {
  func.func @_conv_stats_kernel(%arg0: i32, %arg1: memref<64x512xbf16, #tpu.memory_space<vmem>>, %arg2: memref<512x32xbf16, #tpu.memory_space<vmem>>, %arg3: memref<64x32xf32, #tpu.memory_space<vmem>>, %arg4: memref<1x64x128xf32, #tpu.memory_space<vmem>>) attributes {dimension_semantics = [#tpu.dimension_semantics<parallel>], iteration_bounds = array<i64: 1>, scalar_prefetch = 0 : i64, scratch_operands = 0 : i64, tpu.core_type = #tpu.core_type<tc>, window_params = [{pipeline_mode = #tpu.pipeline_mode<synchronous>, transform_indices = @transform_0, window_bounds = array<i64: 64, 512>}, {transform_indices = @transform_1, window_bounds = array<i64: 512, 32>}, {transform_indices = @transform_2, window_bounds = array<i64: 64, 32>}, {transform_indices = @transform_3, window_bounds = array<i64: 1, 64, 128>}]} {
    %c0 = arith.constant 0 : index
    %c0_0 = arith.constant 0 : index
    %0 = vector.load %arg1[%c0, %c0_0] : memref<64x512xbf16, #tpu.memory_space<vmem>>, vector<64x512xbf16>
    %c0_1 = arith.constant 0 : index
    %c0_2 = arith.constant 0 : index
    %1 = vector.load %arg2[%c0_1, %c0_2] : memref<512x32xbf16, #tpu.memory_space<vmem>>, vector<512x32xbf16>
    %cst = arith.constant dense<0.000000e+00> : vector<64x32xf32>
    %2 = tpu.matmul %0, %1, %cst {dimension_numbers = #tpu.dot_dimension_numbers<[1], [0], [0], [1], [0, 0, 1, 1], [], []>} : vector<64x512xbf16>, vector<512x32xbf16>, vector<64x32xf32> -> vector<64x32xf32>
    %c0_3 = arith.constant 0 : index
    %c0_4 = arith.constant 0 : index
    %3 = vector.load %arg3[%c0_3, %c0_4] : memref<64x32xf32, #tpu.memory_space<vmem>>, vector<64x32xf32>
    tpu.vector_store %arg3[%c0_3, %c0_4], %2 {strides = array<i32>} : memref<64x32xf32, #tpu.memory_space<vmem>>, vector<64x32xf32>,
    %cst_5 = arith.constant dense<0.000000e+00> : vector<64xf32>
    %4 = vector.multi_reduction <add>, %2, %cst_5 [1] : vector<64x32xf32> to vector<64xf32>
    %5 = vector.shape_cast %4 : vector<64xf32> to vector<64x1xf32>
    %6 = arith.mulf %2, %2 : vector<64x32xf32>
    %cst_6 = arith.constant dense<0.000000e+00> : vector<64xf32>
    %7 = vector.multi_reduction <add>, %6, %cst_6 [1] : vector<64x32xf32> to vector<64xf32>
    %8 = vector.shape_cast %7 : vector<64xf32> to vector<64x1xf32>
    %9 = tpu.iota {dimensions = array<i32: 1>} : vector<64x128xi32>
    %c0_i32 = arith.constant 0 : i32
    %10 = vector.broadcast %c0_i32 : i32 to vector<64x128xi32>
    %11 = arith.cmpi eq, %9, %10 : vector<64x128xi32>
    %c1_i32 = arith.constant 1 : i32
    %12 = vector.broadcast %c1_i32 : i32 to vector<64x128xi32>
    %13 = arith.cmpi eq, %9, %12 : vector<64x128xi32>
    %cst_7 = arith.constant 0.000000e+00 : f32
    %14 = vector.shape_cast %8 : vector<64x1xf32> to vector<64x1xf32>
    %15 = vector.broadcast %14 : vector<64x1xf32> to vector<64x128xf32>
    %16 = vector.broadcast %cst_7 : f32 to vector<64x128xf32>
    %17 = arith.select %13, %15, %16 : vector<64x128xi1>, vector<64x128xf32>
    %18 = vector.shape_cast %5 : vector<64x1xf32> to vector<64x1xf32>
    %19 = vector.broadcast %18 : vector<64x1xf32> to vector<64x128xf32>
    %20 = arith.select %11, %19, %17 : vector<64x128xi1>, vector<64x128xf32>
    %21 = vector.shape_cast %20 : vector<64x128xf32> to vector<1x64x128xf32>
    %c0_8 = arith.constant 0 : index
    %c0_9 = arith.constant 0 : index
    %c0_10 = arith.constant 0 : index
    %22 = vector.load %arg4[%c0_8, %c0_9, %c0_10] : memref<1x64x128xf32, #tpu.memory_space<vmem>>, vector<1x64x128xf32>
    tpu.vector_store %arg4[%c0_8, %c0_9, %c0_10], %21 {strides = array<i32>} : memref<1x64x128xf32, #tpu.memory_space<vmem>>, vector<1x64x128xf32>,
    return
  }
  func.func @transform_0(%arg0: i32) -> (i32, i32) {
    %c0_i32 = arith.constant 0 : i32
    %c0_i32_0 = arith.constant 0 : i32
    %c0_i32_1 = arith.constant 0 : i32
    return %c0_i32, %c0_i32_0 : i32, i32
  }
  func.func @transform_1(%arg0: i32) -> (i32, i32) {
    %c0_i32 = arith.constant 0 : i32
    %c0_i32_0 = arith.constant 0 : i32
    return %c0_i32, %arg0 : i32, i32
  }
  func.func @transform_2(%arg0: i32) -> (i32, i32) {
    %c0_i32 = arith.constant 0 : i32
    %c0_i32_0 = arith.constant 0 : i32
    return %c0_i32, %arg0 : i32, i32
  }
  func.func @transform_3(%arg0: i32) -> (i32, i32, i32) {
    %c0_i32 = arith.constant 0 : i32
    %c0_i32_0 = arith.constant 0 : i32
    %c0_i32_1 = arith.constant 0 : i32
    return %arg0, %c0_i32, %c0_i32_0 : i32, i32, i32
  }
}

module attributes {stable_mosaic.version = 11 : i64} {
  func.func @_bn_lrelu_kernel(%arg0: i32, %arg1: memref<64x32xf32, #tpu.memory_space<vmem>>, %arg2: memref<64x1xf32, #tpu.memory_space<vmem>>, %arg3: memref<64x1xf32, #tpu.memory_space<vmem>>, %arg4: memref<64x32xbf16, #tpu.memory_space<vmem>>) attributes {dimension_semantics = [#tpu.dimension_semantics<parallel>], iteration_bounds = array<i64: 1>, scalar_prefetch = 0 : i64, scratch_operands = 0 : i64, tpu.core_type = #tpu.core_type<tc>, window_params = [{transform_indices = @transform_0, window_bounds = array<i64: 64, 32>}, {pipeline_mode = #tpu.pipeline_mode<synchronous>, transform_indices = @transform_1, window_bounds = array<i64: 64, 1>}, {pipeline_mode = #tpu.pipeline_mode<synchronous>, transform_indices = @transform_2, window_bounds = array<i64: 64, 1>}, {transform_indices = @transform_3, window_bounds = array<i64: 64, 32>}]} {
    %c0 = arith.constant 0 : index
    %c0_0 = arith.constant 0 : index
    %0 = vector.load %arg1[%c0, %c0_0] : memref<64x32xf32, #tpu.memory_space<vmem>>, vector<64x32xf32>
    %c0_1 = arith.constant 0 : index
    %c0_2 = arith.constant 0 : index
    %1 = vector.load %arg2[%c0_1, %c0_2] : memref<64x1xf32, #tpu.memory_space<vmem>>, vector<64x1xf32>
    %2 = vector.broadcast %1 : vector<64x1xf32> to vector<64x32xf32>
    %3 = arith.mulf %0, %2 : vector<64x32xf32>
    %c0_3 = arith.constant 0 : index
    %c0_4 = arith.constant 0 : index
    %4 = vector.load %arg3[%c0_3, %c0_4] : memref<64x1xf32, #tpu.memory_space<vmem>>, vector<64x1xf32>
    %5 = vector.broadcast %4 : vector<64x1xf32> to vector<64x32xf32>
    %6 = arith.addf %3, %5 : vector<64x32xf32>
    %cst = arith.constant 0.000000e+00 : f32
    %7 = vector.broadcast %cst : f32 to vector<64x32xf32>
    %8 = arith.cmpf ogt, %6, %7 : vector<64x32xf32>
    %cst_5 = arith.constant 2.000000e-01 : f32
    %9 = vector.broadcast %cst_5 : f32 to vector<64x32xf32>
    %10 = arith.mulf %9, %6 : vector<64x32xf32>
    %11 = arith.select %8, %6, %10 : vector<64x32xi1>, vector<64x32xf32>
    %12 = arith.truncf %11 : vector<64x32xf32> to vector<64x32xbf16>
    %c0_6 = arith.constant 0 : index
    %c0_7 = arith.constant 0 : index
    %13 = vector.load %arg4[%c0_6, %c0_7] : memref<64x32xbf16, #tpu.memory_space<vmem>>, vector<64x32xbf16>
    tpu.vector_store %arg4[%c0_6, %c0_7], %12 {strides = array<i32>} : memref<64x32xbf16, #tpu.memory_space<vmem>>, vector<64x32xbf16>,
    return
  }
  func.func @transform_0(%arg0: i32) -> (i32, i32) {
    %c0_i32 = arith.constant 0 : i32
    %c0_i32_0 = arith.constant 0 : i32
    return %c0_i32, %arg0 : i32, i32
  }
  func.func @transform_1(%arg0: i32) -> (i32, i32) {
    %c0_i32 = arith.constant 0 : i32
    %c0_i32_0 = arith.constant 0 : i32
    %c0_i32_1 = arith.constant 0 : i32
    return %c0_i32, %c0_i32_0 : i32, i32
  }
  func.func @transform_2(%arg0: i32) -> (i32, i32) {
    %c0_i32 = arith.constant 0 : i32
    %c0_i32_0 = arith.constant 0 : i32
    %c0_i32_1 = arith.constant 0 : i32
    return %c0_i32, %c0_i32_0 : i32, i32
  }
  func.func @transform_3(%arg0: i32) -> (i32, i32) {
    %c0_i32 = arith.constant 0 : i32
    %c0_i32_0 = arith.constant 0 : i32
    return %c0_i32, %arg0 : i32, i32
  }
}

</mosaic_0001>

<llo_original>
// kernel: discriminator_forward.7
$region0: #{discriminator_forward.7}
  #allocation0 [shape = 'u32[]', space=smem, size = 0x4, offset = 0x4, fixed_abs, tag = 'smem constant byte address 0x4 - core index']
  #allocation1 [shape = 'u32[144,128]{1,0:T(1,128)}', space=vmem, size = 0x12000, scoped, tag = 'internal scratch']
  %s0 = inlined_call_operand.vmem [shape: bf16[8,48], index: 0, kind: input, shape index: {}]
  %s1 = inlined_call_operand.vmem [shape: bf16[48,2048], index: 1, kind: input, shape index: {}]
  %s2 = inlined_call_operand.vmem [shape: f32[8,1], index: 2, kind: input, shape index: {}]
  %s3 = inlined_call_operand.vmem [shape: bf16[8,2048], index: 3, kind: output, shape index: {}]
  %s4 = sld [smem:[#allocation0]]
  $region68: #{discriminator_forward.7} parent=0
    _
  %s6 = ssub.s32 1, %s4
  %s7 = scalar_select 0, %s6, %s4
  $region1: #{discriminator_forward.7} parent=0
    #allocation2 [shape = 'u8[196608]{0}', space=vmem, size = 0x30000, scoped, tag = 'input window, operand 1']
    loop: start=0, step=1, limit=4
    $region2: #{discriminator_forward.7} parent=1 // loop_pre_header
      _
    $region3: #{discriminator_forward.7} parent=1 // loop_header
      %s9 = sphi 0, %s13
      %p10 = scmp.ge.s32.totalorder %s9, 4
      %s17 = sphi 0, %s17
      %s19 = sphi 0, %s17
      %s20 = sphi 0, %s19
      %s34 = sphi 0, %s20
      %s40 = sphi 0, %s42
      %s43 = sphi 0, %s40
      %s44 = sphi 0, %s43
      %s60 = sphi 0, %s44
      %s64 = sphi 0, %s64
      %s66 = sphi 0, %s64
      %s67 = sphi 0, %s66
      %s81 = sphi 0, %s67
      %s87 = sphi 0, %s89
      %s90 = sphi 0, %s87
      %s91 = sphi 0, %s90
      %s107 = sphi 0, %s91
    $region4: #{discriminator_forward.7} parent=1 // loop_header_branch
      %12 = sbr.rel (%p10) target = $region8
    $region5: #{discriminator_forward.7} parent=1 // loop_body
      %s14 = ssub.s32 %s9, 1
      %s15 = ssub.s32 %s9, 2
      %s16 = sadd.s32 %s9, 1
      %s18 = sadd.s32 %s17, 1
      %p21 = scmp.eq.s32.totalorder %s9, 1
      %p22 = scmp.ne.s32.totalorder %s17, %s19
      %p23 = scmp.eq.s32.totalorder %s9, 0
      %p24 = por %p22, %p23
      %p25 = scmp.ne.s32.totalorder %s17, %s19
      %p26 = scmp.eq.s32.totalorder %s14, 1
      %p27 = por %p25, %p26
      %p28 = scmp.ne.s32.totalorder %s19, %s20
      %p29 = scmp.eq.s32.totalorder %s14, 0
      %p30 = por %p28, %p29
      %p31 = scmp.ne.s32.totalorder %s19, %s20
      %p32 = scmp.eq.s32.totalorder %s15, 1
      %p33 = por %p31, %p32
      %p35 = scmp.ne.s32.totalorder %s20, %s34
      %p36 = scmp.eq.s32.totalorder %s15, 0
      %p37 = por %p35, %p36
      %s38 = ssub.s32 %s9, %s16
      %p39 = scmp.eq.s32.totalorder %s38, 0
      %s41 = sadd.s32 %s40, 1
      %s42 = scalar_select %p39, %s40, %s41
      %p45 = pneg %p39
      %p46 = scmp.eq.s32.totalorder %s9, 1
      %p47 = por %p45, %p46
      %p48 = scmp.ne.s32.totalorder %s40, %s43
      %p49 = scmp.eq.s32.totalorder %s9, 0
      %p50 = por %p48, %p49
      %p51 = scmp.ne.s32.totalorder %s40, %s43
      %p52 = scmp.eq.s32.totalorder %s14, 1
      %p53 = por %p51, %p52
      %p54 = scmp.ne.s32.totalorder %s43, %s44
      %p55 = scmp.eq.s32.totalorder %s14, 0
      %p56 = por %p54, %p55
      %p57 = scmp.ne.s32.totalorder %s43, %s44
      %p58 = scmp.eq.s32.totalorder %s15, 1
      %p59 = por %p57, %p58
      %p61 = scmp.ne.s32.totalorder %s44, %s60
      %p62 = scmp.eq.s32.totalorder %s15, 0
      %p63 = por %p61, %p62
      %s65 = sadd.s32 %s64, 1
      %p68 = scmp.eq.s32.totalorder %s9, 1
      %p69 = scmp.ne.s32.totalorder %s64, %s66
      %p70 = scmp.eq.s32.totalorder %s9, 0
      %p71 = por %p69, %p70
      %p72 = scmp.ne.s32.totalorder %s64, %s66
      %p73 = scmp.eq.s32.totalorder %s14, 1
      %p74 = por %p72, %p73
      %p75 = scmp.ne.s32.totalorder %s66, %s67
      %p76 = scmp.eq.s32.totalorder %s14, 0
      %p77 = por %p75, %p76
      %p78 = scmp.ne.s32.totalorder %s66, %s67
      %p79 = scmp.eq.s32.totalorder %s15, 1
      %p80 = por %p78, %p79
      %p82 = scmp.ne.s32.totalorder %s67, %s81
      %p83 = scmp.eq.s32.totalorder %s15, 0
      %p84 = por %p82, %p83
      %s85 = ssub.s32 %s9, %s16
      %p86 = scmp.eq.s32.totalorder %s85, 0
      %s88 = sadd.s32 %s87, 1
      %s89 = scalar_select %p86, %s87, %s88
      %p92 = pneg %p86
      %p93 = scmp.eq.s32.totalorder %s9, 1
      %p94 = por %p92, %p93
      %p95 = scmp.ne.s32.totalorder %s87, %s90
      %p96 = scmp.eq.s32.totalorder %s9, 0
      %p97 = por %p95, %p96
      %p98 = scmp.ne.s32.totalorder %s87, %s90
      %p99 = scmp.eq.s32.totalorder %s14, 1
      %p100 = por %p98, %p99
      %p101 = scmp.ne.s32.totalorder %s90, %s91
      %p102 = scmp.eq.s32.totalorder %s14, 0
      %p103 = por %p101, %p102
      %p104 = scmp.ne.s32.totalorder %s90, %s91
      %p105 = scmp.eq.s32.totalorder %s15, 1
      %p106 = por %p104, %p105
      %p108 = scmp.ne.s32.totalorder %s91, %s107
      %p109 = scmp.eq.s32.totalorder %s15, 0
      %p110 = por %p108, %p109
      %p111 = scmp.le.s32.totalorder 1, %s9
      %p112 = scmp.lt.s32.totalorder %s9, 3
      %p113 = pnand %p111, %p112
      %p114 = pneg %p113
      // Predicated region
      $region9: #{discriminator_forward.7} parent=5 // pred_check
        _
      $region10: #{discriminator_forward.7} parent=5 // pred_check_branch
        %116 = sbr.rel (%p113) target = $region12
      $region11: #{discriminator_forward.7} parent=5 // pred_region
        %s117 = ssub.s32 %s9, 1
        // Predicated region
        $region13: #{discriminator_forward.7} parent=11 // pred_check
          %p118 = pneg %p30
        $region14: #{discriminator_forward.7} parent=11 // pred_check_branch
          %120 = sbr.rel (%p118) target = $region16
        $region15: #{discriminator_forward.7} parent=11 // pred_region
          _
        $region16: #{discriminator_forward.7} parent=11 // pred_fallthru
          _
        // Predicated region
        $region17: #{discriminator_forward.7} parent=11 // pred_check
          %p121 = pneg %p77
        $region18: #{discriminator_forward.7} parent=11 // pred_check_branch
          %123 = sbr.rel (%p121) target = $region20
        $region19: #{discriminator_forward.7} parent=11 // pred_region
          _
        $region20: #{discriminator_forward.7} parent=11 // pred_fallthru
          _
      $region12: #{discriminator_forward.7} parent=5 // pred_fallthru
        _
      %p124 = scmp.lt.s32.totalorder %s9, 2
      // Predicated region
      $region21: #{discriminator_forward.7} parent=5 // pred_check
        %p125 = pneg %p124
      $region22: #{discriminator_forward.7} parent=5 // pred_check_branch
        %127 = sbr.rel (%p125) target = $region24
      $region23: #{discriminator_forward.7} parent=5 // pred_region
        // Predicated region
        $region25: #{discriminator_forward.7} parent=23 // pred_check
          %p128 = pneg %p50
        $region26: #{discriminator_forward.7} parent=23 // pred_check_branch
          %130 = sbr.rel (%p128) target = $region28
        $region27: #{discriminator_forward.7} parent=23 // pred_region
          %s131 = sand.u32 %s40, 1
          %s132 = sand.u32 %s40, 1
          %s133 = smul.addr %s132, 192
          %s134 = scalar_lea.vmem [#allocation2], %s133
          %s135 = smul.u32 8, %s9
          %s136 = smul.addr %s135, 4
          %s137 = scalar_lea.vmem %s1, %s136
          // Predicated region
          $region29: #{discriminator_forward.7} parent=27 // pred_check
            _
          $region30: #{discriminator_forward.7} parent=27 // pred_check_branch
            %139 = sbr.rel (0) target = $region32
          $region31: #{discriminator_forward.7} parent=27 // pred_region
            // Predicated region
            $region33: #{discriminator_forward.7} parent=31 // pred_check
              _
            $region34: #{discriminator_forward.7} parent=31 // pred_check_branch
              %141 = sbr.rel (0) target = $region36
            $region35: #{discriminator_forward.7} parent=31 // pred_region
              loop: start=0, step=1, limit=1
              $region37: #{discriminator_forward.7} parent=35 // loop_pre_header
                _
              $region38: #{discriminator_forward.7} parent=35 // loop_header
                %s143 = sphi 0, %s147
                %p144 = scmp.ge.s32.totalorder %s143, 1
                %s148 = sphi %s137, %s137
                %s149 = sphi %s134, %s134
              $region39: #{discriminator_forward.7} parent=35 // loop_header_branch
                %146 = sbr.rel (%p144) target = $region43
              $region40: #{discriminator_forward.7} parent=35 // loop_body
                %v150 = vld [vmem:[%s148] sm:$0xff]
                %151 = vst [vmem:[%s149] sm:$0xff] %v150
                %v152 = vld [vmem:[%s148 + $0x8] sm:$0xff]
                %153 = vst [vmem:[%s149 + $0x8] sm:$0xff] %v152
                %v154 = vld [vmem:[%s148 + $0x10] sm:$0xff]
                %155 = vst [vmem:[%s149 + $0x10] sm:$0xff] %v154
                %v156 = vld [vmem:[%s148 + $0x18] sm:$0xff]
                %157 = vst [vmem:[%s149 + $0x18] sm:$0xff] %v156
                %v158 = vld [vmem:[%s148 + $0x40] sm:$0xff]
                %159 = vst [vmem:[%s149 + $0x20] sm:$0xff] %v158
                %v160 = vld [vmem:[%s148 + $0x48] sm:$0xff]
                %161 = vst [vmem:[%s149 + $0x28] sm:$0xff] %v160
                %v162 = vld [vmem:[%s148 + $0x50] sm:$0xff]
                %163 = vst [vmem:[%s149 + $0x30] sm:$0xff] %v162
                %v164 = vld [vmem:[%s148 + $0x58] sm:$0xff]
                %165 = vst [vmem:[%s149 + $0x38] sm:$0xff] %v164
                %v166 = vld [vmem:[%s148 + $0x80] sm:$0xff]
                %167 = vst [vmem:[%s149 + $0x40] sm:$0xff] %v166
                %v168 = vld [vmem:[%s148 + $0x88] sm:$0xff]
                %169 = vst [vmem:[%s149 + $0x48] sm:$0xff] %v168
                %v170 = vld [vmem:[%s148 + $0x90] sm:$0xff]
                %171 = vst [vmem:[%s149 + $0x50] sm:$0xff] %v170
                %v172 = vld [vmem:[%s148 + $0x98] sm:$0xff]
                %173 = vst [vmem:[%s149 + $0x58] sm:$0xff] %v172
                %v174 = vld [vmem:[%s148 + $0xc0] sm:$0xff]
                %175 = vst [vmem:[%s149 + $0x60] sm:$0xff] %v174
                %v176 = vld [vmem:[%s148 + $0xc8] sm:$0xff]
                %177 = vst [vmem:[%s149 + $0x68] sm:$0xff] %v176
                %v178 = vld [vmem:[%s148 + $0xd0] sm:$0xff]
                %179 = vst [vmem:[%s149 + $0x70] sm:$0xff] %v178
                %v180 = vld [vmem:[%s148 + $0xd8] sm:$0xff]
                %181 = vst [vmem:[%s149 + $0x78] sm:$0xff] %v180
                %v182 = vld [vmem:[%s148 + $0x100] sm:$0xff]
                %183 = vst [vmem:[%s149 + $0x80] sm:$0xff] %v182
                %v184 = vld [vmem:[%s148 + $0x108] sm:$0xff]
                %185 = vst [vmem:[%s149 + $0x88] sm:$0xff] %v184
                %v186 = vld [vmem:[%s148 + $0x110] sm:$0xff]
                %187 = vst [vmem:[%s149 + $0x90] sm:$0xff] %v186
                %v188 = vld [vmem:[%s148 + $0x118] sm:$0xff]
                %189 = vst [vmem:[%s149 + $0x98] sm:$0xff] %v188
                %v190 = vld [vmem:[%s148 + $0x140] sm:$0xff]
                %191 = vst [vmem:[%s149 + $0xa0] sm:$0xff] %v190
                %v192 = vld [vmem:[%s148 + $0x148] sm:$0xff]
                %193 = vst [vmem:[%s149 + $0xa8] sm:$0xff] %v192
                %v194 = vld [vmem:[%s148 + $0x150] sm:$0xff]
                %195 = vst [vmem:[%s149 + $0xb0] sm:$0xff] %v194
                %v196 = vld [vmem:[%s148 + $0x158] sm:$0xff]
                %197 = vst [vmem:[%s149 + $0xb8] sm:$0xff] %v196
              $region41: #{discriminator_forward.7} parent=35 // loop_footer
                %s147 = sadd.s32 1, %s143
              $region42: #{discriminator_forward.7} parent=35 // loop_footer_branch
                %142 = sbr.rel target = $region38
              $region43: #{discriminator_forward.7} parent=35 // loop_exit
                _
            $region36: #{discriminator_forward.7} parent=31 // pred_fallthru
              _
            // Predicated region
            $region44: #{discriminator_forward.7} parent=31 // pred_check
              _
            $region45: #{discriminator_forward.7} parent=31 // pred_check_branch
              %199 = sbr.rel target = $region47
            $region46: #{discriminator_forward.7} parent=31 // pred_region
              _
            $region47: #{discriminator_forward.7} parent=31 // pred_fallthru
              _
          $region32: #{discriminator_forward.7} parent=27 // pred_fallthru
            _
          %200 = vnop
        $region28: #{discriminator_forward.7} parent=23 // pred_fallthru
          _
      $region24: #{discriminator_forward.7} parent=5 // pred_fallthru
        _
      %p201 = scmp.le.s32.totalorder 1, %s9
      %p202 = scmp.lt.s32.totalorder %s9, 3
      %p203 = pnand %p201, %p202
      %p204 = pneg %p203
      // Predicated region
      $region48: #{discriminator_forward.7} parent=5 // pred_check
        _
      $region49: #{discriminator_forward.7} parent=5 // pred_check_branch
        %206 = sbr.rel (%p203) target = $region51
      $region50: #{discriminator_forward.7} parent=5 // pred_region
        %s207 = ssub.s32 %s9, 1
        %s208 = sand.u32 %s43, 1
        %s209 = sand.u32 %s43, 1
        %s210 = smul.addr %s209, 192
        %s211 = scalar_lea.vmem [#allocation2], %s210
        // Predicated region
        $region52: #{discriminator_forward.7} parent=50 // pred_check
          %p212 = pneg %p56
        $region53: #{discriminator_forward.7} parent=50 // pred_check_branch
          %214 = sbr.rel (%p212) target = $region55
        $region54: #{discriminator_forward.7} parent=50 // pred_region
          _
        $region55: #{discriminator_forward.7} parent=50 // pred_fallthru
          _
        %p215 = pneg %p30
        %p216 = pneg %p27
        %s217 = sand.u32 %s43, 1
        %s218 = sand.u32 %s43, 1
        %s219 = smul.addr %s218, 192
        %s220 = scalar_lea.vmem [#allocation2], %s219
        %p221 = pneg %p56
        %p222 = pneg %p53
        %p223 = pneg %p77
        %p224 = pneg %p74
        %p225 = pneg %p103
        %p226 = pneg %p100
        %s227 = smul.u32 8, %s14
        %p228 = scmp.lt.s32.totalorder %s227, 15
        %s229 = scalar_select %p228, %s227, 15
        %s230 = smul.addr %s229, 4
        %s231 = scalar_lea.vmem %s3, %s230
        %s232 = smul.u32 8, %s14
        %s233 = smul.u32 8, %s14
        %p234 = scmp.lt.s32.totalorder %s233, 15
        %s235 = scalar_select %p234, %s233, 15
        %s236 = smul.addr %s235, 4
        %s237 = scalar_lea.vmem %s3, %s236
        %s238 = smul.u32 8, %s14
        %v240 = vld [vmem:[%s0] sm:$0xf]
        %v241 = vld [vmem:[%s211] sm:$0xff]
        %v242 = vld [vmem:[%s211 + $0x8] sm:$0xff]
        %v243 = vld [vmem:[%s211 + $0x10] sm:$0xff]
        %v244 = vld [vmem:[%s211 + $0x18] sm:$0xff]
        %v245 = vld [vmem:[%s211 + $0x20] sm:$0xff]
        %v246 = vld [vmem:[%s211 + $0x28] sm:$0xff]
        %v247 = vld [vmem:[%s211 + $0x30] sm:$0xff]
        %v248 = vld [vmem:[%s211 + $0x38] sm:$0xff]
        %v249 = vld [vmem:[%s211 + $0x40] sm:$0xff]
        %v250 = vld [vmem:[%s211 + $0x48] sm:$0xff]
        %v251 = vld [vmem:[%s211 + $0x50] sm:$0xff]
        %v252 = vld [vmem:[%s211 + $0x58] sm:$0xff]
        %v253 = vld [vmem:[%s211 + $0x60] sm:$0xff]
        %v254 = vld [vmem:[%s211 + $0x68] sm:$0xff]
        %v255 = vld [vmem:[%s211 + $0x70] sm:$0xff]
        %v256 = vld [vmem:[%s211 + $0x78] sm:$0xff]
        %v257 = vld [vmem:[%s211 + $0x80] sm:$0xff]
        %v258 = vld [vmem:[%s211 + $0x88] sm:$0xff]
        %v259 = vld [vmem:[%s211 + $0x90] sm:$0xff]
        %v260 = vld [vmem:[%s211 + $0x98] sm:$0xff]
        %v261 = vld [vmem:[%s211 + $0xa0] sm:$0xff]
        %v262 = vld [vmem:[%s211 + $0xa8] sm:$0xff]
        %v263 = vld [vmem:[%s211 + $0xb0] sm:$0xff]
        %v264 = vld [vmem:[%s211 + $0xb8] sm:$0xff]
        %v265 = vld [vmem:[%s2] sm:$0xff]
        %267 = vset.pattern.permute.xlu0 0
        %268 = vperm.xlu0 %267, %v265
        %v269 = vpop.permute.xlu0 %268
        %v295 = vunpack.c.l.b16 %v241
        %v296 = vunpack.c.h.b16 %v241
        %v297 = vunpack.c.l.b16 %v242
        %v298 = vunpack.c.h.b16 %v242
        %v299 = vunpack.c.l.b16 %v243
        %v300 = vunpack.c.h.b16 %v243
        %v301 = vunpack.c.l.b16 %v244
        %v302 = vunpack.c.h.b16 %v244
        %v303 = vunpack.c.l.b16 %v245
        %v304 = vunpack.c.h.b16 %v245
        %v305 = vunpack.c.l.b16 %v246
        %v306 = vunpack.c.h.b16 %v246
        %v307 = vunpack.c.l.b16 %v247
        %v308 = vunpack.c.h.b16 %v247
        %v309 = vunpack.c.l.b16 %v248
        %v310 = vunpack.c.h.b16 %v248
        %v311 = vunpack.c.l.b16 %v249
        %v312 = vunpack.c.h.b16 %v249
        %v313 = vunpack.c.l.b16 %v250
        %v314 = vunpack.c.h.b16 %v250
        %v315 = vunpack.c.l.b16 %v251
        %v316 = vunpack.c.h.b16 %v251
        %v317 = vunpack.c.l.b16 %v252
        %v318 = vunpack.c.h.b16 %v252
        %v319 = vunpack.c.l.b16 %v253
        %v320 = vunpack.c.h.b16 %v253
        %v321 = vunpack.c.l.b16 %v254
        %v322 = vunpack.c.h.b16 %v254
        %v323 = vunpack.c.l.b16 %v255
        %v324 = vunpack.c.h.b16 %v255
        %v325 = vunpack.c.l.b16 %v256
        %v326 = vunpack.c.h.b16 %v256
        %v327 = vunpack.c.l.b16 %v257
        %v328 = vunpack.c.h.b16 %v257
        %v329 = vunpack.c.l.b16 %v258
        %v330 = vunpack.c.h.b16 %v258
        %v331 = vunpack.c.l.b16 %v259
        %v332 = vunpack.c.h.b16 %v259
        %v333 = vunpack.c.l.b16 %v260
        %v334 = vunpack.c.h.b16 %v260
        %v335 = vunpack.c.l.b16 %v261
        %v336 = vunpack.c.h.b16 %v261
        %v337 = vunpack.c.l.b16 %v262
        %v338 = vunpack.c.h.b16 %v262
        %v339 = vunpack.c.l.b16 %v263
        %v340 = vunpack.c.h.b16 %v263
        %v341 = vunpack.c.l.b16 %v264
        %v342 = vunpack.c.h.b16 %v264
        %v343 = vpack.c.b16 %v303, %v295
        %v344 = vpack.c.b16 %v304, %v296
        %v345 = vpack.c.b16 %v305, %v297
        %v346 = vpack.c.b16 %v306, %v298
        %v347 = vpack.c.b16 %v307, %v299
        %v348 = vpack.c.b16 %v308, %v300
        %v349 = vpack.c.b16 %v309, %v301
        %v350 = vpack.c.b16 %v310, %v302
        %v351 = vpack.c.b16 %v319, %v311
        %v352 = vpack.c.b16 %v320, %v312
        %v353 = vpack.c.b16 %v321, %v313
        %v354 = vpack.c.b16 %v322, %v314
        %v355 = vpack.c.b16 %v323, %v315
        %v356 = vpack.c.b16 %v324, %v316
        %v357 = vpack.c.b16 %v325, %v317
        %v358 = vpack.c.b16 %v326, %v318
        %v359 = vpack.c.b16 %v335, %v327
        %v360 = vpack.c.b16 %v336, %v328
        %v361 = vpack.c.b16 %v337, %v329
        %v362 = vpack.c.b16 %v338, %v330
        %v363 = vpack.c.b16 %v339, %v331
        %v364 = vpack.c.b16 %v340, %v332
        %v365 = vpack.c.b16 %v341, %v333
        %v366 = vpack.c.b16 %v342, %v334
        %vm391 = vcmask 392192
        %v393 = vsel %vm391, %v240, 0
        %395 = vmatprep.subr.bf16.mxu0 %v344
        %396 = vmatpush1.bf16.msra.mxu0 %v343
        %397 = vmatprep.subr.bf16.mxu0 %v352
        %398 = vmatpush1.bf16.msra.mxu0 %v351
        %399 = vmatprep.subr.bf16.mxu0 %v360
        %400 = vmatpush1.bf16.msra.mxu0 %v359
        %401 = vmatprep.subr.bf16.mxu0 0
        %402 = vmatpush1.bf16.msra.mxu0 0
        %403 = vmatprep.subr.bf16.mxu0 0
        %404 = vmatpush1.bf16.msra.mxu0 0
        %405 = vmatprep.subr.bf16.mxu0 0
        %406 = vmatpush1.bf16.msra.mxu0 0
        %407 = vmatprep.subr.bf16.mxu0 0
        %408 = vmatpush1.bf16.msra.mxu0 0
        %409 = vmatprep.subr.bf16.mxu0 0
        %410 = vmatpush1.bf16.msra.mxu0 0
        %411 = vmatprep.subr.bf16.mxu0 0
        %412 = vmatpush1.bf16.msra.mxu0 0
        %413 = vmatprep.subr.bf16.mxu0 0
        %414 = vmatpush1.bf16.msra.mxu0 0
        %415 = vmatprep.subr.bf16.mxu0 0
        %416 = vmatpush1.bf16.msra.mxu0 0
        %417 = vmatprep.subr.bf16.mxu0 0
        %418 = vmatpush1.bf16.msra.mxu0 0
        %419 = vmatprep.subr.bf16.mxu0 0
        %420 = vmatpush1.bf16.msra.mxu0 0
        %421 = vmatprep.subr.bf16.mxu0 0
        %422 = vmatpush1.bf16.msra.mxu0 0
        %423 = vmatprep.subr.bf16.mxu0 0
        %424 = vmatpush1.bf16.msra.mxu0 0
        %425 = vmatprep.subr.bf16.mxu0 0
        %426 = vmatpush1.bf16.msra.mxu0 0
        %427 = vmatprep.mubr.bf16.mxu0 0
        %428 = vmatmul.mubr.bf16.gmra.mrb[0].mxu0 %v393
        %v429 = vpop.f32.mrb[0].mxu0
        %v430 = vadd.f32 %v269, %v429
        %v431 = vpop.f32.mrb[0].mxu0
        %v432 = vadd.f32 %v269, %v431
        %v433 = vpop.f32.mrb[0].mxu0
        %v434 = vpop.f32.mrb[0].mxu0
        %435 = vdwg.mxu0
        %436 = vmatprep.subr.bf16.mxu0 %v346
        %437 = vmatpush1.bf16.msra.mxu0 %v345
        %438 = vmatprep.subr.bf16.mxu0 %v354
        %439 = vmatpush1.bf16.msra.mxu0 %v353
        %440 = vmatprep.subr.bf16.mxu0 %v362
        %441 = vmatpush1.bf16.msra.mxu0 %v361
        %442 = vmatprep.subr.bf16.mxu0 0
        %443 = vmatpush1.bf16.msra.mxu0 0
        %444 = vmatprep.subr.bf16.mxu0 0
        %445 = vmatpush1.bf16.msra.mxu0 0
        %446 = vmatprep.subr.bf16.mxu0 0
        %447 = vmatpush1.bf16.msra.mxu0 0
        %448 = vmatprep.subr.bf16.mxu0 0
        %449 = vmatpush1.bf16.msra.mxu0 0
        %450 = vmatprep.subr.bf16.mxu0 0
        %451 = vmatpush1.bf16.msra.mxu0 0
        %452 = vmatprep.subr.bf16.mxu0 0
        %453 = vmatpush1.bf16.msra.mxu0 0
        %454 = vmatprep.subr.bf16.mxu0 0
        %455 = vmatpush1.bf16.msra.mxu0 0
        %456 = vmatprep.subr.bf16.mxu0 0
        %457 = vmatpush1.bf16.msra.mxu0 0
        %458 = vmatprep.subr.bf16.mxu0 0
        %459 = vmatpush1.bf16.msra.mxu0 0
        %460 = vmatprep.subr.bf16.mxu0 0
        %461 = vmatpush1.bf16.msra.mxu0 0
        %462 = vmatprep.subr.bf16.mxu0 0
        %463 = vmatpush1.bf16.msra.mxu0 0
        %464 = vmatprep.subr.bf16.mxu0 0
        %465 = vmatpush1.bf16.msra.mxu0 0
        %466 = vmatprep.subr.bf16.mxu0 0
        %467 = vmatpush1.bf16.msra.mxu0 0
        %468 = vmatprep.mubr.bf16.mxu0 0
        %469 = vmatmul.mubr.bf16.gmra.mrb[0].mxu0 %v393
        %v470 = vpop.f32.mrb[0].mxu0
        %v471 = vadd.f32 %v269, %v470
        %v472 = vpop.f32.mrb[0].mxu0
        %v473 = vadd.f32 %v269, %v472
        %v474 = vpop.f32.mrb[0].mxu0
        %v475 = vpop.f32.mrb[0].mxu0
        %476 = vdwg.mxu0
        %477 = vmatprep.subr.bf16.mxu0 %v348
        %478 = vmatpush1.bf16.msra.mxu0 %v347
        %479 = vmatprep.subr.bf16.mxu0 %v356
        %480 = vmatpush1.bf16.msra.mxu0 %v355
        %481 = vmatprep.subr.bf16.mxu0 %v364
        %482 = vmatpush1.bf16.msra.mxu0 %v363
        %483 = vmatprep.subr.bf16.mxu0 0
        %484 = vmatpush1.bf16.msra.mxu0 0
        %485 = vmatprep.subr.bf16.mxu0 0
        %486 = vmatpush1.bf16.msra.mxu0 0
        %487 = vmatprep.subr.bf16.mxu0 0
        %488 = vmatpush1.bf16.msra.mxu0 0
        %489 = vmatprep.subr.bf16.mxu0 0
        %490 = vmatpush1.bf16.msra.mxu0 0
        %491 = vmatprep.subr.bf16.mxu0 0
        %492 = vmatpush1.bf16.msra.mxu0 0
        %493 = vmatprep.subr.bf16.mxu0 0
        %494 = vmatpush1.bf16.msra.mxu0 0
        %495 = vmatprep.subr.bf16.mxu0 0
        %496 = vmatpush1.bf16.msra.mxu0 0
        %497 = vmatprep.subr.bf16.mxu0 0
        %498 = vmatpush1.bf16.msra.mxu0 0
        %499 = vmatprep.subr.bf16.mxu0 0
        %500 = vmatpush1.bf16.msra.mxu0 0
        %501 = vmatprep.subr.bf16.mxu0 0
        %502 = vmatpush1.bf16.msra.mxu0 0
        %503 = vmatprep.subr.bf16.mxu0 0
        %504 = vmatpush1.bf16.msra.mxu0 0
        %505 = vmatprep.subr.bf16.mxu0 0
        %506 = vmatpush1.bf16.msra.mxu0 0
        %507 = vmatprep.subr.bf16.mxu0 0
        %508 = vmatpush1.bf16.msra.mxu0 0
        %509 = vmatprep.mubr.bf16.mxu0 0
        %510 = vmatmul.mubr.bf16.gmra.mrb[0].mxu0 %v393
        %v511 = vpop.f32.mrb[0].mxu0
        %v512 = vadd.f32 %v269, %v511
        %v513 = vpop.f32.mrb[0].mxu0
        %v514 = vadd.f32 %v269, %v513
        %v515 = vpop.f32.mrb[0].mxu0
        %v516 = vpop.f32.mrb[0].mxu0
        %517 = vdwg.mxu0
        %518 = vmatprep.subr.bf16.mxu0 %v350
        %519 = vmatpush1.bf16.msra.mxu0 %v349
        %520 = vmatprep.subr.bf16.mxu0 %v358
        %521 = vmatpush1.bf16.msra.mxu0 %v357
        %522 = vmatprep.subr.bf16.mxu0 %v366
        %523 = vmatpush1.bf16.msra.mxu0 %v365
        %524 = vmatprep.subr.bf16.mxu0 0
        %525 = vmatpush1.bf16.msra.mxu0 0
        %526 = vmatprep.subr.bf16.mxu0 0
        %527 = vmatpush1.bf16.msra.mxu0 0
        %528 = vmatprep.subr.bf16.mxu0 0
        %529 = vmatpush1.bf16.msra.mxu0 0
        %530 = vmatprep.subr.bf16.mxu0 0
        %531 = vmatpush1.bf16.msra.mxu0 0
        %532 = vmatprep.subr.bf16.mxu0 0
        %533 = vmatpush1.bf16.msra.mxu0 0
        %534 = vmatprep.subr.bf16.mxu0 0
        %535 = vmatpush1.bf16.msra.mxu0 0
        %536 = vmatprep.subr.bf16.mxu0 0
        %537 = vmatpush1.bf16.msra.mxu0 0
        %538 = vmatprep.subr.bf16.mxu0 0
        %539 = vmatpush1.bf16.msra.mxu0 0
        %540 = vmatprep.subr.bf16.mxu0 0
        %541 = vmatpush1.bf16.msra.mxu0 0
        %542 = vmatprep.subr.bf16.mxu0 0
        %543 = vmatpush1.bf16.msra.mxu0 0
        %544 = vmatprep.subr.bf16.mxu0 0
        %545 = vmatpush1.bf16.msra.mxu0 0
        %546 = vmatprep.subr.bf16.mxu0 0
        %547 = vmatpush1.bf16.msra.mxu0 0
        %548 = vmatprep.subr.bf16.mxu0 0
        %549 = vmatpush1.bf16.msra.mxu0 0
        %550 = vmatprep.mubr.bf16.mxu0 0
        %551 = vmatmul.mubr.bf16.gmra.mrb[0].mxu0 %v393
        %v552 = vpop.f32.mrb[0].mxu0
        %v553 = vadd.f32 %v269, %v552
        %v554 = vpop.f32.mrb[0].mxu0
        %v555 = vadd.f32 %v269, %v554
        %v556 = vpop.f32.mrb[0].mxu0
        %v557 = vpop.f32.mrb[0].mxu0
        %558 = vdwg.mxu0
        %vm559 = vcmp.gt.f32.partialorder %v430, 0.0
        %vm560 = vcmp.gt.f32.partialorder %v432, 0.0
        %vm561 = vcmp.gt.f32.partialorder %v471, 0.0
        %vm562 = vcmp.gt.f32.partialorder %v473, 0.0
        %vm563 = vcmp.gt.f32.partialorder %v512, 0.0
        %vm564 = vcmp.gt.f32.partialorder %v514, 0.0
        %vm565 = vcmp.gt.f32.partialorder %v553, 0.0
        %vm566 = vcmp.gt.f32.partialorder %v555, 0.0
        %v567 = vmul.f32 %v430, 0.2
        %v568 = vmul.f32 %v432, 0.2
        %v569 = vmul.f32 %v471, 0.2
        %v570 = vmul.f32 %v473, 0.2
        %v571 = vmul.f32 %v512, 0.2
        %v572 = vmul.f32 %v514, 0.2
        %v573 = vmul.f32 %v553, 0.2
        %v574 = vmul.f32 %v555, 0.2
        %v575 = vsel %vm559, %v430, %v567
        %v576 = vsel %vm560, %v432, %v568
        %v577 = vsel %vm561, %v471, %v569
        %v578 = vsel %vm562, %v473, %v570
        %v579 = vsel %vm563, %v512, %v571
        %v580 = vsel %vm564, %v514, %v572
        %v581 = vsel %vm565, %v553, %v573
        %v582 = vsel %vm566, %v555, %v574
        %v583 = vpack.c.bf16 %v575, %v575
        %v584 = vpack.c.bf16 %v576, %v576
        %v585 = vpack.c.bf16 %v577, %v577
        %v586 = vpack.c.bf16 %v578, %v578
        %v587 = vpack.c.bf16 %v579, %v579
        %v588 = vpack.c.bf16 %v580, %v580
        %v589 = vpack.c.bf16 %v581, %v581
        %v590 = vpack.c.bf16 %v582, %v582
        %v599 = vunpack.c.l.b16 %v583
        %v600 = vunpack.c.l.b16 %v584
        %v601 = vunpack.c.l.b16 %v585
        %v602 = vunpack.c.l.b16 %v586
        %v603 = vunpack.c.l.b16 %v587
        %v604 = vunpack.c.l.b16 %v588
        %v605 = vunpack.c.l.b16 %v589
        %v606 = vunpack.c.l.b16 %v590
        %v607 = vpack.c.b16 %v600, %v599
        %v608 = vpack.c.b16 %v602, %v601
        %v609 = vpack.c.b16 %v604, %v603
        %v610 = vpack.c.b16 %v606, %v605
        %615 = vst [vmem:[%s237] sm:$0xff] %v607
        %616 = vst [vmem:[%s237 + $0x8] sm:$0xff] %v608
        %617 = vst [vmem:[%s237 + $0x10] sm:$0xff] %v609
        %618 = vst [vmem:[%s237 + $0x18] sm:$0xff] %v610
        %s619 = smul.u32 8, %s14
        %p620 = scmp.lt.s32.totalorder %s619, 15
        %s621 = scalar_select %p620, %s619, 15
        %s622 = smul.addr %s621, 4
        %s623 = scalar_lea.vmem %s3, %s622
        // Predicated region
        $region56: #{discriminator_forward.7} parent=50 // pred_check
          %p624 = pneg %p100
        $region57: #{discriminator_forward.7} parent=50 // pred_check_branch
          %626 = sbr.rel (%p624) target = $region59
        $region58: #{discriminator_forward.7} parent=50 // pred_region
          %s627 = smul.u32 8, %s14
        $region59: #{discriminator_forward.7} parent=50 // pred_fallthru
          _
      $region51: #{discriminator_forward.7} parent=5 // pred_fallthru
        _
      %p628 = scmp.le.s32.totalorder 2, %s9
      // Predicated region
      $region60: #{discriminator_forward.7} parent=5 // pred_check
        %p629 = pneg %p628
      $region61: #{discriminator_forward.7} parent=5 // pred_check_branch
        %631 = sbr.rel (%p629) target = $region63
      $region62: #{discriminator_forward.7} parent=5 // pred_region
        %s632 = ssub.s32 %s9, 2
        // Predicated region
        $region64: #{discriminator_forward.7} parent=62 // pred_check
          %p633 = pneg %p106
        $region65: #{discriminator_forward.7} parent=62 // pred_check_branch
          %635 = sbr.rel (%p633) target = $region67
        $region66: #{discriminator_forward.7} parent=62 // pred_region
          %s636 = smul.u32 8, %s15
          %p637 = scmp.lt.s32.totalorder %s636, 15
          %s638 = scalar_select %p637, %s636, 15
          %s639 = smul.addr %s638, 4
          %s640 = scalar_lea.vmem %s3, %s639
        $region67: #{discriminator_forward.7} parent=62 // pred_fallthru
          _
      $region63: #{discriminator_forward.7} parent=5 // pred_fallthru
        _
    $region6: #{discriminator_forward.7} parent=1 // loop_footer
      %s13 = sadd.s32 1, %s9
    $region7: #{discriminator_forward.7} parent=1 // loop_footer_branch
      %8 = sbr.rel target = $region3
    $region8: #{discriminator_forward.7} parent=1 // loop_exit
      _

// kernel: discriminator_forward.8
$region0: #{discriminator_forward.8}
  #allocation0 [shape = 'u32[]', space=smem, size = 0x4, offset = 0x4, fixed_abs, tag = 'smem constant byte address 0x4 - core index']
  #allocation1 [shape = 'u32[144,128]{1,0:T(1,128)}', space=vmem, size = 0x12000, scoped, tag = 'internal scratch']
  %s0 = inlined_call_operand.vmem [shape: bf16[16,128], index: 0, kind: input, shape index: {}]
  %s1 = inlined_call_operand.vmem [shape: bf16[128,512], index: 1, kind: input, shape index: {}]
  %s2 = inlined_call_operand.vmem [shape: f32[16,512], index: 2, kind: output, shape index: {0}]
  %s3 = inlined_call_operand.vmem [shape: f32[1,16,128], index: 3, kind: output, shape index: {1}]
  %4 = xla_tuple %s2, %s3
  %s5 = sld [smem:[#allocation0]]
  $region26: #{discriminator_forward.8} parent=0
    _
  %s7 = ssub.s32 1, %s5
  %s8 = scalar_select 0, %s7, %s5
  // Predicated region
  $region2: #{discriminator_forward.8} parent=0 // pred_check
    _
  $region3: #{discriminator_forward.8} parent=0 // pred_check_branch
    %10 = sbr.rel (0) target = $region5
  $region4: #{discriminator_forward.8} parent=0 // pred_region
    _
  $region5: #{discriminator_forward.8} parent=0 // pred_fallthru
    _
  // Predicated region
  $region6: #{discriminator_forward.8} parent=0 // pred_check
    _
  $region7: #{discriminator_forward.8} parent=0 // pred_check_branch
    %12 = sbr.rel (0) target = $region9
  $region8: #{discriminator_forward.8} parent=0 // pred_region
    _
  $region9: #{discriminator_forward.8} parent=0 // pred_fallthru
    _
  %v14 = vld [vmem:[%s0] sm:$0xf]
  %v15 = vld [vmem:[%s0 + $0x4] sm:$0xf]
  %v16 = vld [vmem:[%s1] sm:$0xff]
  %v17 = vld [vmem:[%s1 + $0x8] sm:$0xff]
  %v18 = vld [vmem:[%s1 + $0x10] sm:$0xff]
  %v19 = vld [vmem:[%s1 + $0x18] sm:$0xff]
  %v20 = vld [vmem:[%s1 + $0x20] sm:$0xff]
  %v21 = vld [vmem:[%s1 + $0x28] sm:$0xff]
  %v22 = vld [vmem:[%s1 + $0x30] sm:$0xff]
  %v23 = vld [vmem:[%s1 + $0x38] sm:$0xff]
  %v24 = vld [vmem:[%s1 + $0x40] sm:$0xff]
  %v25 = vld [vmem:[%s1 + $0x48] sm:$0xff]
  %v26 = vld [vmem:[%s1 + $0x50] sm:$0xff]
  %v27 = vld [vmem:[%s1 + $0x58] sm:$0xff]
  %v28 = vld [vmem:[%s1 + $0x60] sm:$0xff]
  %v29 = vld [vmem:[%s1 + $0x68] sm:$0xff]
  %v30 = vld [vmem:[%s1 + $0x70] sm:$0xff]
  %v31 = vld [vmem:[%s1 + $0x78] sm:$0xff]
  %v32 = vld [vmem:[%s1 + $0x80] sm:$0xff]
  %v33 = vld [vmem:[%s1 + $0x88] sm:$0xff]
  %v34 = vld [vmem:[%s1 + $0x90] sm:$0xff]
  %v35 = vld [vmem:[%s1 + $0x98] sm:$0xff]
  %v36 = vld [vmem:[%s1 + $0xa0] sm:$0xff]
  %v37 = vld [vmem:[%s1 + $0xa8] sm:$0xff]
  %v38 = vld [vmem:[%s1 + $0xb0] sm:$0xff]
  %v39 = vld [vmem:[%s1 + $0xb8] sm:$0xff]
  %v40 = vld [vmem:[%s1 + $0xc0] sm:$0xff]
  %v41 = vld [vmem:[%s1 + $0xc8] sm:$0xff]
  %v42 = vld [vmem:[%s1 + $0xd0] sm:$0xff]
  %v43 = vld [vmem:[%s1 + $0xd8] sm:$0xff]
  %v44 = vld [vmem:[%s1 + $0xe0] sm:$0xff]
  %v45 = vld [vmem:[%s1 + $0xe8] sm:$0xff]
  %v46 = vld [vmem:[%s1 + $0xf0] sm:$0xff]
  %v47 = vld [vmem:[%s1 + $0xf8] sm:$0xff]
  %v50 = vunpack.c.l.b16 %v14
  %v51 = vunpack.c.l.b16 %v15
  %v52 = vpack.c.b16 %v51, %v50
  %v86 = vunpack.c.l.b16 %v16
  %v87 = vunpack.c.h.b16 %v16
  %v88 = vunpack.c.l.b16 %v17
  %v89 = vunpack.c.h.b16 %v17
  %v90 = vunpack.c.l.b16 %v18
  %v91 = vunpack.c.h.b16 %v18
  %v92 = vunpack.c.l.b16 %v19
  %v93 = vunpack.c.h.b16 %v19
  %v94 = vunpack.c.l.b16 %v20
  %v95 = vunpack.c.h.b16 %v20
  %v96 = vunpack.c.l.b16 %v21
  %v97 = vunpack.c.h.b16 %v21
  %v98 = vunpack.c.l.b16 %v22
  %v99 = vunpack.c.h.b16 %v22
  %v100 = vunpack.c.l.b16 %v23
  %v101 = vunpack.c.h.b16 %v23
  %v102 = vunpack.c.l.b16 %v24
  %v103 = vunpack.c.h.b16 %v24
  %v104 = vunpack.c.l.b16 %v25
  %v105 = vunpack.c.h.b16 %v25
  %v106 = vunpack.c.l.b16 %v26
  %v107 = vunpack.c.h.b16 %v26
  %v108 = vunpack.c.l.b16 %v27
  %v109 = vunpack.c.h.b16 %v27
  %v110 = vunpack.c.l.b16 %v28
  %v111 = vunpack.c.h.b16 %v28
  %v112 = vunpack.c.l.b16 %v29
  %v113 = vunpack.c.h.b16 %v29
  %v114 = vunpack.c.l.b16 %v30
  %v115 = vunpack.c.h.b16 %v30
  %v116 = vunpack.c.l.b16 %v31
  %v117 = vunpack.c.h.b16 %v31
  %v118 = vunpack.c.l.b16 %v32
  %v119 = vunpack.c.h.b16 %v32
  %v120 = vunpack.c.l.b16 %v33
  %v121 = vunpack.c.h.b16 %v33
  %v122 = vunpack.c.l.b16 %v34
  %v123 = vunpack.c.h.b16 %v34
  %v124 = vunpack.c.l.b16 %v35
  %v125 = vunpack.c.h.b16 %v35
  %v126 = vunpack.c.l.b16 %v36
  %v127 = vunpack.c.h.b16 %v36
  %v128 = vunpack.c.l.b16 %v37
  %v129 = vunpack.c.h.b16 %v37
  %v130 = vunpack.c.l.b16 %v38
  %v131 = vunpack.c.h.b16 %v38
  %v132 = vunpack.c.l.b16 %v39
  %v133 = vunpack.c.h.b16 %v39
  %v134 = vunpack.c.l.b16 %v40
  %v135 = vunpack.c.h.b16 %v40
  %v136 = vunpack.c.l.b16 %v41
  %v137 = vunpack.c.h.b16 %v41
  %v138 = vunpack.c.l.b16 %v42
  %v139 = vunpack.c.h.b16 %v42
  %v140 = vunpack.c.l.b16 %v43
  %v141 = vunpack.c.h.b16 %v43
  %v142 = vunpack.c.l.b16 %v44
  %v143 = vunpack.c.h.b16 %v44
  %v144 = vunpack.c.l.b16 %v45
  %v145 = vunpack.c.h.b16 %v45
  %v146 = vunpack.c.l.b16 %v46
  %v147 = vunpack.c.h.b16 %v46
  %v148 = vunpack.c.l.b16 %v47
  %v149 = vunpack.c.h.b16 %v47
  %v150 = vpack.c.b16 %v90, %v86
  %v151 = vpack.c.b16 %v91, %v87
  %v152 = vpack.c.b16 %v92, %v88
  %v153 = vpack.c.b16 %v93, %v89
  %v154 = vpack.c.b16 %v98, %v94
  %v155 = vpack.c.b16 %v99, %v95
  %v156 = vpack.c.b16 %v100, %v96
  %v157 = vpack.c.b16 %v101, %v97
  %v158 = vpack.c.b16 %v106, %v102
  %v159 = vpack.c.b16 %v107, %v103
  %v160 = vpack.c.b16 %v108, %v104
  %v161 = vpack.c.b16 %v109, %v105
  %v162 = vpack.c.b16 %v114, %v110
  %v163 = vpack.c.b16 %v115, %v111
  %v164 = vpack.c.b16 %v116, %v112
  %v165 = vpack.c.b16 %v117, %v113
  %v166 = vpack.c.b16 %v122, %v118
  %v167 = vpack.c.b16 %v123, %v119
  %v168 = vpack.c.b16 %v124, %v120
  %v169 = vpack.c.b16 %v125, %v121
  %v170 = vpack.c.b16 %v130, %v126
  %v171 = vpack.c.b16 %v131, %v127
  %v172 = vpack.c.b16 %v132, %v128
  %v173 = vpack.c.b16 %v133, %v129
  %v174 = vpack.c.b16 %v138, %v134
  %v175 = vpack.c.b16 %v139, %v135
  %v176 = vpack.c.b16 %v140, %v136
  %v177 = vpack.c.b16 %v141, %v137
  %v178 = vpack.c.b16 %v146, %v142
  %v179 = vpack.c.b16 %v147, %v143
  %v180 = vpack.c.b16 %v148, %v144
  %v181 = vpack.c.b16 %v149, %v145
  %214 = vmatprep.subr.bf16.mxu0 %v151
  %215 = vmatpush1.bf16.msra.mxu0 %v150
  %216 = vmatprep.subr.bf16.mxu0 %v155
  %217 = vmatpush1.bf16.msra.mxu0 %v154
  %218 = vmatprep.subr.bf16.mxu0 %v159
  %219 = vmatpush1.bf16.msra.mxu0 %v158
  %220 = vmatprep.subr.bf16.mxu0 %v163
  %221 = vmatpush1.bf16.msra.mxu0 %v162
  %222 = vmatprep.subr.bf16.mxu0 %v167
  %223 = vmatpush1.bf16.msra.mxu0 %v166
  %224 = vmatprep.subr.bf16.mxu0 %v171
  %225 = vmatpush1.bf16.msra.mxu0 %v170
  %226 = vmatprep.subr.bf16.mxu0 %v175
  %227 = vmatpush1.bf16.msra.mxu0 %v174
  %228 = vmatprep.subr.bf16.mxu0 %v179
  %229 = vmatpush1.bf16.msra.mxu0 %v178
  %230 = vmatprep.subr.bf16.mxu0 0
  %231 = vmatpush1.bf16.msra.mxu0 0
  %232 = vmatprep.subr.bf16.mxu0 0
  %233 = vmatpush1.bf16.msra.mxu0 0
  %234 = vmatprep.subr.bf16.mxu0 0
  %235 = vmatpush1.bf16.msra.mxu0 0
  %236 = vmatprep.subr.bf16.mxu0 0
  %237 = vmatpush1.bf16.msra.mxu0 0
  %238 = vmatprep.subr.bf16.mxu0 0
  %239 = vmatpush1.bf16.msra.mxu0 0
  %240 = vmatprep.subr.bf16.mxu0 0
  %241 = vmatpush1.bf16.msra.mxu0 0
  %242 = vmatprep.subr.bf16.mxu0 0
  %243 = vmatpush1.bf16.msra.mxu0 0
  %244 = vmatprep.subr.bf16.mxu0 0
  %245 = vmatpush1.bf16.msra.mxu0 0
  %246 = vmatprep.mubr.bf16.mxu0 0
  %247 = vmatmul.mubr.bf16.gmra.mrb[0].mxu0 %v52
  %v248 = vpop.f32.mrb[0].mxu0
  %v249 = vadd.f32 0.0, %v248
  %v250 = vpop.f32.mrb[0].mxu0
  %v251 = vadd.f32 0.0, %v250
  %v252 = vpop.f32.mrb[0].mxu0
  %v253 = vadd.f32 0.0, %v252
  %v254 = vpop.f32.mrb[0].mxu0
  %v255 = vadd.f32 0.0, %v254
  %256 = vdwg.mxu0
  %257 = vmatprep.subr.bf16.mxu0 %v153
  %258 = vmatpush1.bf16.msra.mxu0 %v152
  %259 = vmatprep.subr.bf16.mxu0 %v157
  %260 = vmatpush1.bf16.msra.mxu0 %v156
  %261 = vmatprep.subr.bf16.mxu0 %v161
  %262 = vmatpush1.bf16.msra.mxu0 %v160
  %263 = vmatprep.subr.bf16.mxu0 %v165
  %264 = vmatpush1.bf16.msra.mxu0 %v164
  %265 = vmatprep.subr.bf16.mxu0 %v169
  %266 = vmatpush1.bf16.msra.mxu0 %v168
  %267 = vmatprep.subr.bf16.mxu0 %v173
  %268 = vmatpush1.bf16.msra.mxu0 %v172
  %269 = vmatprep.subr.bf16.mxu0 %v177
  %270 = vmatpush1.bf16.msra.mxu0 %v176
  %271 = vmatprep.subr.bf16.mxu0 %v181
  %272 = vmatpush1.bf16.msra.mxu0 %v180
  %273 = vmatprep.subr.bf16.mxu0 0
  %274 = vmatpush1.bf16.msra.mxu0 0
  %275 = vmatprep.subr.bf16.mxu0 0
  %276 = vmatpush1.bf16.msra.mxu0 0
  %277 = vmatprep.subr.bf16.mxu0 0
  %278 = vmatpush1.bf16.msra.mxu0 0
  %279 = vmatprep.subr.bf16.mxu0 0
  %280 = vmatpush1.bf16.msra.mxu0 0
  %281 = vmatprep.subr.bf16.mxu0 0
  %282 = vmatpush1.bf16.msra.mxu0 0
  %283 = vmatprep.subr.bf16.mxu0 0
  %284 = vmatpush1.bf16.msra.mxu0 0
  %285 = vmatprep.subr.bf16.mxu0 0
  %286 = vmatpush1.bf16.msra.mxu0 0
  %287 = vmatprep.subr.bf16.mxu0 0
  %288 = vmatpush1.bf16.msra.mxu0 0
  %289 = vmatprep.mubr.bf16.mxu0 0
  %290 = vmatmul.mubr.bf16.gmra.mrb[0].mxu0 %v52
  %v291 = vpop.f32.mrb[0].mxu0
  %v292 = vadd.f32 0.0, %v291
  %v293 = vpop.f32.mrb[0].mxu0
  %v294 = vadd.f32 0.0, %v293
  %v295 = vpop.f32.mrb[0].mxu0
  %v296 = vadd.f32 0.0, %v295
  %v297 = vpop.f32.mrb[0].mxu0
  %v298 = vadd.f32 0.0, %v297
  %299 = vdwg.mxu0
  %300 = vst [vmem:[%s2] sm:$0xff] %v249
  %301 = vst [vmem:[%s2 + $0x8] sm:$0xff] %v251
  %302 = vst [vmem:[%s2 + $0x10] sm:$0xff] %v292
  %303 = vst [vmem:[%s2 + $0x18] sm:$0xff] %v294
  %304 = vst [vmem:[%s2 + $0x20] sm:$0xff] %v253
  %305 = vst [vmem:[%s2 + $0x28] sm:$0xff] %v255
  %306 = vst [vmem:[%s2 + $0x30] sm:$0xff] %v296
  %307 = vst [vmem:[%s2 + $0x38] sm:$0xff] %v298
  %v308 = vadd.f32 %v249, %v251
  %v309 = vadd.f32 %v308, %v292
  %v310 = vadd.f32 %v309, %v294
  %311 = vadd.xlane.f32.xlu0 %v310
  %v312 = vpop.xlane.xlu0 %311
  %v313 = vadd.f32 %v253, %v255
  %v314 = vadd.f32 %v313, %v296
  %v315 = vadd.f32 %v314, %v298
  %316 = vadd.xlane.f32.xlu0 %v315
  %v317 = vpop.xlane.xlu0 %316
  %v318 = vmul.f32 %v249, %v249
  %v319 = vmul.f32 %v251, %v251
  %v320 = vmul.f32 %v292, %v292
  %v321 = vmul.f32 %v294, %v294
  %v322 = vmul.f32 %v253, %v253
  %v323 = vmul.f32 %v255, %v255
  %v324 = vmul.f32 %v296, %v296
  %v325 = vmul.f32 %v298, %v298
  %v326 = vadd.f32 %v318, %v319
  %v327 = vadd.f32 %v326, %v320
  %v328 = vadd.f32 %v327, %v321
  %329 = vadd.xlane.f32.xlu0 %v328
  %v330 = vpop.xlane.xlu0 %329
  %v331 = vadd.f32 %v322, %v323
  %v332 = vadd.f32 %v331, %v324
  %v333 = vadd.f32 %v332, %v325
  %334 = vadd.xlane.f32.xlu0 %v333
  %v335 = vpop.xlane.xlu0 %334
  %v336 = vlaneseq
  %v337 = vand.u32 %v336, 127
  %vm338 = vcmp.eq.s32.totalorder %v337, 0
  %vm339 = vcmp.eq.s32.totalorder %v337, 1
  %v340 = vsel %vm339, %v330, 0.0
  %v341 = vsel %vm339, %v335, 0.0
  %v342 = vsel %vm338, %v312, %v340
  %v343 = vsel %vm338, %v317, %v341
  %344 = vst [vmem:[%s3] sm:$0xff] %v342
  %345 = vst [vmem:[%s3 + $0x8] sm:$0xff] %v343
  // Predicated region
  $region10: #{discriminator_forward.8} parent=0 // pred_check
    _
  $region11: #{discriminator_forward.8} parent=0 // pred_check_branch
    %347 = sbr.rel (0) target = $region13
  $region12: #{discriminator_forward.8} parent=0 // pred_region
    _
  $region13: #{discriminator_forward.8} parent=0 // pred_fallthru
    _
  // Predicated region
  $region14: #{discriminator_forward.8} parent=0 // pred_check
    _
  $region15: #{discriminator_forward.8} parent=0 // pred_check_branch
    %349 = sbr.rel (0) target = $region17
  $region16: #{discriminator_forward.8} parent=0 // pred_region
    _
  $region17: #{discriminator_forward.8} parent=0 // pred_fallthru
    _
  // Predicated region
  $region18: #{discriminator_forward.8} parent=0 // pred_check
    _
  $region19: #{discriminator_forward.8} parent=0 // pred_check_branch
    %351 = sbr.rel (0) target = $region21
  $region20: #{discriminator_forward.8} parent=0 // pred_region
    _
  $region21: #{discriminator_forward.8} parent=0 // pred_fallthru
    _
  // Predicated region
  $region22: #{discriminator_forward.8} parent=0 // pred_check
    _
  $region23: #{discriminator_forward.8} parent=0 // pred_check_branch
    %353 = sbr.rel (0) target = $region25
  $region24: #{discriminator_forward.8} parent=0 // pred_region
    _
  $region25: #{discriminator_forward.8} parent=0 // pred_fallthru
    _

// kernel: discriminator_forward.9
$region0: #{discriminator_forward.9}
  #allocation0 [shape = 'u32[]', space=smem, size = 0x4, offset = 0x4, fixed_abs, tag = 'smem constant byte address 0x4 - core index']
  #allocation1 [shape = 'u32[144,128]{1,0:T(1,128)}', space=vmem, size = 0x12000, scoped, tag = 'internal scratch']
  %s0 = inlined_call_operand.vmem [shape: f32[16,512], index: 0, kind: input, shape index: {}]
  %s1 = inlined_call_operand.vmem [shape: f32[16,1], index: 1, kind: input, shape index: {}]
  %s2 = inlined_call_operand.vmem [shape: f32[16,1], index: 2, kind: input, shape index: {}]
  %s3 = inlined_call_operand.vmem [shape: bf16[16,512], index: 3, kind: output, shape index: {}]
  %s4 = sld [smem:[#allocation0]]
  $region22: #{discriminator_forward.9} parent=0
    _
  %s6 = ssub.s32 1, %s4
  %s7 = scalar_select 0, %s6, %s4
  // Predicated region
  $region2: #{discriminator_forward.9} parent=0 // pred_check
    _
  $region3: #{discriminator_forward.9} parent=0 // pred_check_branch
    %9 = sbr.rel (0) target = $region5
  $region4: #{discriminator_forward.9} parent=0 // pred_region
    _
  $region5: #{discriminator_forward.9} parent=0 // pred_fallthru
    _
  // Predicated region
  $region6: #{discriminator_forward.9} parent=0 // pred_check
    _
  $region7: #{discriminator_forward.9} parent=0 // pred_check_branch
    %11 = sbr.rel (0) target = $region9
  $region8: #{discriminator_forward.9} parent=0 // pred_region
    _
  $region9: #{discriminator_forward.9} parent=0 // pred_fallthru
    _
  // Predicated region
  $region10: #{discriminator_forward.9} parent=0 // pred_check
    _
  $region11: #{discriminator_forward.9} parent=0 // pred_check_branch
    %13 = sbr.rel (0) target = $region13
  $region12: #{discriminator_forward.9} parent=0 // pred_region
    _
  $region13: #{discriminator_forward.9} parent=0 // pred_fallthru
    _
  %v14 = vld [vmem:[%s0] sm:$0xff]
  %v15 = vld [vmem:[%s0 + $0x8] sm:$0xff]
  %v16 = vld [vmem:[%s0 + $0x10] sm:$0xff]
  %v17 = vld [vmem:[%s0 + $0x18] sm:$0xff]
  %v18 = vld [vmem:[%s0 + $0x20] sm:$0xff]
  %v19 = vld [vmem:[%s0 + $0x28] sm:$0xff]
  %v20 = vld [vmem:[%s0 + $0x30] sm:$0xff]
  %v21 = vld [vmem:[%s0 + $0x38] sm:$0xff]
  %v22 = vld [vmem:[%s1] sm:$0xff]
  %v23 = vld [vmem:[%s1 + $0x8] sm:$0xff]
  %25 = vset.pattern.permute.xlu0 0
  %26 = vperm.xlu0 %25, %v22
  %v27 = vpop.permute.xlu0 %26
  %30 = vset.pattern.permute.xlu0 0
  %31 = vperm.xlu0 %30, %v23
  %v32 = vpop.permute.xlu0 %31
  %v34 = vmul.f32 %v14, %v27
  %v35 = vmul.f32 %v15, %v27
  %v36 = vmul.f32 %v16, %v27
  %v37 = vmul.f32 %v17, %v27
  %v38 = vmul.f32 %v18, %v32
  %v39 = vmul.f32 %v19, %v32
  %v40 = vmul.f32 %v20, %v32
  %v41 = vmul.f32 %v21, %v32
  %v42 = vld [vmem:[%s2] sm:$0xff]
  %v43 = vld [vmem:[%s2 + $0x8] sm:$0xff]
  %45 = vset.pattern.permute.xlu0 0
  %46 = vperm.xlu0 %45, %v42
  %v47 = vpop.permute.xlu0 %46
  %50 = vset.pattern.permute.xlu0 0
  %51 = vperm.xlu0 %50, %v43
  %v52 = vpop.permute.xlu0 %51
  %v54 = vadd.f32 %v34, %v47
  %v55 = vadd.f32 %v35, %v47
  %v56 = vadd.f32 %v36, %v47
  %v57 = vadd.f32 %v37, %v47
  %v58 = vadd.f32 %v38, %v52
  %v59 = vadd.f32 %v39, %v52
  %v60 = vadd.f32 %v40, %v52
  %v61 = vadd.f32 %v41, %v52
  %vm62 = vcmp.gt.f32.partialorder %v54, 0.0
  %vm63 = vcmp.gt.f32.partialorder %v55, 0.0
  %vm64 = vcmp.gt.f32.partialorder %v56, 0.0
  %vm65 = vcmp.gt.f32.partialorder %v57, 0.0
  %vm66 = vcmp.gt.f32.partialorder %v58, 0.0
  %vm67 = vcmp.gt.f32.partialorder %v59, 0.0
  %vm68 = vcmp.gt.f32.partialorder %v60, 0.0
  %vm69 = vcmp.gt.f32.partialorder %v61, 0.0
  %v70 = vmul.f32 %v54, 0.2
  %v71 = vmul.f32 %v55, 0.2
  %v72 = vmul.f32 %v56, 0.2
  %v73 = vmul.f32 %v57, 0.2
  %v74 = vmul.f32 %v58, 0.2
  %v75 = vmul.f32 %v59, 0.2
  %v76 = vmul.f32 %v60, 0.2
  %v77 = vmul.f32 %v61, 0.2
  %v78 = vsel %vm62, %v54, %v70
  %v79 = vsel %vm63, %v55, %v71
  %v80 = vsel %vm64, %v56, %v72
  %v81 = vsel %vm65, %v57, %v73
  %v82 = vsel %vm66, %v58, %v74
  %v83 = vsel %vm67, %v59, %v75
  %v84 = vsel %vm68, %v60, %v76
  %v85 = vsel %vm69, %v61, %v77
  %v86 = vpack.c.bf16 %v82, %v78
  %v87 = vpack.c.bf16 %v83, %v79
  %v88 = vpack.c.bf16 %v84, %v80
  %v89 = vpack.c.bf16 %v85, %v81
  %v94 = vunpack.c.l.b16 %v86
  %v95 = vunpack.c.l.b16 %v87
  %v96 = vunpack.c.l.b16 %v88
  %v97 = vunpack.c.l.b16 %v89
  %v98 = vunpack.c.h.b16 %v86
  %v99 = vunpack.c.h.b16 %v87
  %v100 = vunpack.c.h.b16 %v88
  %v101 = vunpack.c.h.b16 %v89
  %v102 = vpack.c.b16 %v95, %v94
  %v103 = vpack.c.b16 %v97, %v96
  %v104 = vpack.c.b16 %v99, %v98
  %v105 = vpack.c.b16 %v101, %v100
  %110 = vst [vmem:[%s3] sm:$0xff] %v102
  %111 = vst [vmem:[%s3 + $0x8] sm:$0xff] %v103
  %112 = vst [vmem:[%s3 + $0x10] sm:$0xff] %v104
  %113 = vst [vmem:[%s3 + $0x18] sm:$0xff] %v105
  // Predicated region
  $region14: #{discriminator_forward.9} parent=0 // pred_check
    _
  $region15: #{discriminator_forward.9} parent=0 // pred_check_branch
    %115 = sbr.rel (0) target = $region17
  $region16: #{discriminator_forward.9} parent=0 // pred_region
    _
  $region17: #{discriminator_forward.9} parent=0 // pred_fallthru
    _
  // Predicated region
  $region18: #{discriminator_forward.9} parent=0 // pred_check
    _
  $region19: #{discriminator_forward.9} parent=0 // pred_check_branch
    %117 = sbr.rel (0) target = $region21
  $region20: #{discriminator_forward.9} parent=0 // pred_region
    _
  $region21: #{discriminator_forward.9} parent=0 // pred_fallthru
    _

// kernel: discriminator_forward.10
$region0: #{discriminator_forward.10}
  #allocation0 [shape = 'u32[]', space=smem, size = 0x4, offset = 0x4, fixed_abs, tag = 'smem constant byte address 0x4 - core index']
  #allocation1 [shape = 'u32[144,128]{1,0:T(1,128)}', space=vmem, size = 0x12000, scoped, tag = 'internal scratch']
  %s0 = inlined_call_operand.vmem [shape: bf16[32,256], index: 0, kind: input, shape index: {}]
  %s1 = inlined_call_operand.vmem [shape: bf16[256,128], index: 1, kind: input, shape index: {}]
  %s2 = inlined_call_operand.vmem [shape: f32[32,128], index: 2, kind: output, shape index: {0}]
  %s3 = inlined_call_operand.vmem [shape: f32[1,32,128], index: 3, kind: output, shape index: {1}]
  %4 = xla_tuple %s2, %s3
  %s5 = sld [smem:[#allocation0]]
  $region26: #{discriminator_forward.10} parent=0
    _
  %s7 = ssub.s32 1, %s5
  %s8 = scalar_select 0, %s7, %s5
  // Predicated region
  $region2: #{discriminator_forward.10} parent=0 // pred_check
    _
  $region3: #{discriminator_forward.10} parent=0 // pred_check_branch
    %10 = sbr.rel (0) target = $region5
  $region4: #{discriminator_forward.10} parent=0 // pred_region
    _
  $region5: #{discriminator_forward.10} parent=0 // pred_fallthru
    _
  // Predicated region
  $region6: #{discriminator_forward.10} parent=0 // pred_check
    _
  $region7: #{discriminator_forward.10} parent=0 // pred_check_branch
    %12 = sbr.rel (0) target = $region9
  $region8: #{discriminator_forward.10} parent=0 // pred_region
    _
  $region9: #{discriminator_forward.10} parent=0 // pred_fallthru
    _
  %v14 = vld [vmem:[%s0] sm:$0xff]
  %v15 = vld [vmem:[%s0 + $0x8] sm:$0xff]
  %v16 = vld [vmem:[%s0 + $0x10] sm:$0xff]
  %v17 = vld [vmem:[%s0 + $0x18] sm:$0xff]
  %v18 = vld [vmem:[%s1] sm:$0xf]
  %v19 = vld [vmem:[%s1 + $0x4] sm:$0xf]
  %v20 = vld [vmem:[%s1 + $0x8] sm:$0xf]
  %v21 = vld [vmem:[%s1 + $0xc] sm:$0xf]
  %v22 = vld [vmem:[%s1 + $0x10] sm:$0xf]
  %v23 = vld [vmem:[%s1 + $0x14] sm:$0xf]
  %v24 = vld [vmem:[%s1 + $0x18] sm:$0xf]
  %v25 = vld [vmem:[%s1 + $0x1c] sm:$0xf]
  %v26 = vld [vmem:[%s1 + $0x20] sm:$0xf]
  %v27 = vld [vmem:[%s1 + $0x24] sm:$0xf]
  %v28 = vld [vmem:[%s1 + $0x28] sm:$0xf]
  %v29 = vld [vmem:[%s1 + $0x2c] sm:$0xf]
  %v30 = vld [vmem:[%s1 + $0x30] sm:$0xf]
  %v31 = vld [vmem:[%s1 + $0x34] sm:$0xf]
  %v32 = vld [vmem:[%s1 + $0x38] sm:$0xf]
  %v33 = vld [vmem:[%s1 + $0x3c] sm:$0xf]
  %v34 = vld [vmem:[%s1 + $0x40] sm:$0xf]
  %v35 = vld [vmem:[%s1 + $0x44] sm:$0xf]
  %v36 = vld [vmem:[%s1 + $0x48] sm:$0xf]
  %v37 = vld [vmem:[%s1 + $0x4c] sm:$0xf]
  %v38 = vld [vmem:[%s1 + $0x50] sm:$0xf]
  %v39 = vld [vmem:[%s1 + $0x54] sm:$0xf]
  %v40 = vld [vmem:[%s1 + $0x58] sm:$0xf]
  %v41 = vld [vmem:[%s1 + $0x5c] sm:$0xf]
  %v42 = vld [vmem:[%s1 + $0x60] sm:$0xf]
  %v43 = vld [vmem:[%s1 + $0x64] sm:$0xf]
  %v44 = vld [vmem:[%s1 + $0x68] sm:$0xf]
  %v45 = vld [vmem:[%s1 + $0x6c] sm:$0xf]
  %v46 = vld [vmem:[%s1 + $0x70] sm:$0xf]
  %v47 = vld [vmem:[%s1 + $0x74] sm:$0xf]
  %v48 = vld [vmem:[%s1 + $0x78] sm:$0xf]
  %v49 = vld [vmem:[%s1 + $0x7c] sm:$0xf]
  %v54 = vunpack.c.l.b16 %v14
  %v55 = vunpack.c.h.b16 %v14
  %v56 = vunpack.c.l.b16 %v15
  %v57 = vunpack.c.h.b16 %v15
  %v58 = vunpack.c.l.b16 %v16
  %v59 = vunpack.c.h.b16 %v16
  %v60 = vunpack.c.l.b16 %v17
  %v61 = vunpack.c.h.b16 %v17
  %v62 = vpack.c.b16 %v56, %v54
  %v63 = vpack.c.b16 %v57, %v55
  %v64 = vpack.c.b16 %v60, %v58
  %v65 = vpack.c.b16 %v61, %v59
  %v102 = vunpack.c.l.b16 %v18
  %v103 = vunpack.c.l.b16 %v19
  %v104 = vunpack.c.l.b16 %v20
  %v105 = vunpack.c.l.b16 %v21
  %v106 = vunpack.c.l.b16 %v22
  %v107 = vunpack.c.l.b16 %v23
  %v108 = vunpack.c.l.b16 %v24
  %v109 = vunpack.c.l.b16 %v25
  %v110 = vunpack.c.l.b16 %v26
  %v111 = vunpack.c.l.b16 %v27
  %v112 = vunpack.c.l.b16 %v28
  %v113 = vunpack.c.l.b16 %v29
  %v114 = vunpack.c.l.b16 %v30
  %v115 = vunpack.c.l.b16 %v31
  %v116 = vunpack.c.l.b16 %v32
  %v117 = vunpack.c.l.b16 %v33
  %v118 = vunpack.c.l.b16 %v34
  %v119 = vunpack.c.l.b16 %v35
  %v120 = vunpack.c.l.b16 %v36
  %v121 = vunpack.c.l.b16 %v37
  %v122 = vunpack.c.l.b16 %v38
  %v123 = vunpack.c.l.b16 %v39
  %v124 = vunpack.c.l.b16 %v40
  %v125 = vunpack.c.l.b16 %v41
  %v126 = vunpack.c.l.b16 %v42
  %v127 = vunpack.c.l.b16 %v43
  %v128 = vunpack.c.l.b16 %v44
  %v129 = vunpack.c.l.b16 %v45
  %v130 = vunpack.c.l.b16 %v46
  %v131 = vunpack.c.l.b16 %v47
  %v132 = vunpack.c.l.b16 %v48
  %v133 = vunpack.c.l.b16 %v49
  %v134 = vpack.c.b16 %v103, %v102
  %v135 = vpack.c.b16 %v105, %v104
  %v136 = vpack.c.b16 %v107, %v106
  %v137 = vpack.c.b16 %v109, %v108
  %v138 = vpack.c.b16 %v111, %v110
  %v139 = vpack.c.b16 %v113, %v112
  %v140 = vpack.c.b16 %v115, %v114
  %v141 = vpack.c.b16 %v117, %v116
  %v142 = vpack.c.b16 %v119, %v118
  %v143 = vpack.c.b16 %v121, %v120
  %v144 = vpack.c.b16 %v123, %v122
  %v145 = vpack.c.b16 %v125, %v124
  %v146 = vpack.c.b16 %v127, %v126
  %v147 = vpack.c.b16 %v129, %v128
  %v148 = vpack.c.b16 %v131, %v130
  %v149 = vpack.c.b16 %v133, %v132
  %166 = vmatprep.subr.bf16.mxu0 0
  %167 = vmatpush1.bf16.msra.mxu0 %v134
  %168 = vmatprep.subr.bf16.mxu0 0
  %169 = vmatpush1.bf16.msra.mxu0 %v135
  %170 = vmatprep.subr.bf16.mxu0 0
  %171 = vmatpush1.bf16.msra.mxu0 %v136
  %172 = vmatprep.subr.bf16.mxu0 0
  %173 = vmatpush1.bf16.msra.mxu0 %v137
  %174 = vmatprep.subr.bf16.mxu0 0
  %175 = vmatpush1.bf16.msra.mxu0 %v138
  %176 = vmatprep.subr.bf16.mxu0 0
  %177 = vmatpush1.bf16.msra.mxu0 %v139
  %178 = vmatprep.subr.bf16.mxu0 0
  %179 = vmatpush1.bf16.msra.mxu0 %v140
  %180 = vmatprep.subr.bf16.mxu0 0
  %181 = vmatpush1.bf16.msra.mxu0 %v141
  %182 = vmatprep.subr.bf16.mxu0 0
  %183 = vmatpush1.bf16.msra.mxu0 %v142
  %184 = vmatprep.subr.bf16.mxu0 0
  %185 = vmatpush1.bf16.msra.mxu0 %v143
  %186 = vmatprep.subr.bf16.mxu0 0
  %187 = vmatpush1.bf16.msra.mxu0 %v144
  %188 = vmatprep.subr.bf16.mxu0 0
  %189 = vmatpush1.bf16.msra.mxu0 %v145
  %190 = vmatprep.subr.bf16.mxu0 0
  %191 = vmatpush1.bf16.msra.mxu0 %v146
  %192 = vmatprep.subr.bf16.mxu0 0
  %193 = vmatpush1.bf16.msra.mxu0 %v147
  %194 = vmatprep.subr.bf16.mxu0 0
  %195 = vmatpush1.bf16.msra.mxu0 %v148
  %196 = vmatprep.subr.bf16.mxu0 0
  %197 = vmatpush1.bf16.msra.mxu0 %v149
  %198 = vmatprep.mubr.bf16.mxu0 %v63
  %199 = vmatmul.mubr.bf16.gmra.mrb[0].mxu0 %v62
  %v200 = vpop.f32.mrb[0].mxu0
  %v201 = vadd.f32 0.0, %v200
  %v202 = vpop.f32.mrb[0].mxu0
  %v203 = vpop.f32.mrb[0].mxu0
  %v204 = vadd.f32 0.0, %v203
  %v205 = vpop.f32.mrb[0].mxu0
  %206 = vmatprep.mubr.bf16.mxu0 %v65
  %207 = vmatmul.mubr.bf16.gmra.mrb[0].mxu0 %v64
  %v208 = vpop.f32.mrb[0].mxu0
  %v209 = vadd.f32 0.0, %v208
  %v210 = vpop.f32.mrb[0].mxu0
  %v211 = vpop.f32.mrb[0].mxu0
  %v212 = vadd.f32 0.0, %v211
  %v213 = vpop.f32.mrb[0].mxu0
  %214 = vdwg.mxu0
  %215 = vst [vmem:[%s2] sm:$0xff] %v201
  %216 = vst [vmem:[%s2 + $0x8] sm:$0xff] %v204
  %217 = vst [vmem:[%s2 + $0x10] sm:$0xff] %v209
  %218 = vst [vmem:[%s2 + $0x18] sm:$0xff] %v212
  %219 = vadd.xlane.f32.xlu0 %v201
  %v220 = vpop.xlane.xlu0 %219
  %221 = vadd.xlane.f32.xlu0 %v204
  %v222 = vpop.xlane.xlu0 %221
  %223 = vadd.xlane.f32.xlu0 %v209
  %v224 = vpop.xlane.xlu0 %223
  %225 = vadd.xlane.f32.xlu0 %v212
  %v226 = vpop.xlane.xlu0 %225
  %v227 = vmul.f32 %v201, %v201
  %v228 = vmul.f32 %v204, %v204
  %v229 = vmul.f32 %v209, %v209
  %v230 = vmul.f32 %v212, %v212
  %231 = vadd.xlane.f32.xlu0 %v227
  %v232 = vpop.xlane.xlu0 %231
  %233 = vadd.xlane.f32.xlu0 %v228
  %v234 = vpop.xlane.xlu0 %233
  %235 = vadd.xlane.f32.xlu0 %v229
  %v236 = vpop.xlane.xlu0 %235
  %237 = vadd.xlane.f32.xlu0 %v230
  %v238 = vpop.xlane.xlu0 %237
  %v239 = vlaneseq
  %v240 = vand.u32 %v239, 127
  %vm241 = vcmp.eq.s32.totalorder %v240, 0
  %vm242 = vcmp.eq.s32.totalorder %v240, 1
  %v243 = vsel %vm242, %v232, 0.0
  %v244 = vsel %vm242, %v234, 0.0
  %v245 = vsel %vm242, %v236, 0.0
  %v246 = vsel %vm242, %v238, 0.0
  %v247 = vsel %vm241, %v220, %v243
  %v248 = vsel %vm241, %v222, %v244
  %v249 = vsel %vm241, %v224, %v245
  %v250 = vsel %vm241, %v226, %v246
  %251 = vst [vmem:[%s3] sm:$0xff] %v247
  %252 = vst [vmem:[%s3 + $0x8] sm:$0xff] %v248
  %253 = vst [vmem:[%s3 + $0x10] sm:$0xff] %v249
  %254 = vst [vmem:[%s3 + $0x18] sm:$0xff] %v250
  // Predicated region
  $region10: #{discriminator_forward.10} parent=0 // pred_check
    _
  $region11: #{discriminator_forward.10} parent=0 // pred_check_branch
    %256 = sbr.rel (0) target = $region13
  $region12: #{discriminator_forward.10} parent=0 // pred_region
    _
  $region13: #{discriminator_forward.10} parent=0 // pred_fallthru
    _
  // Predicated region
  $region14: #{discriminator_forward.10} parent=0 // pred_check
    _
  $region15: #{discriminator_forward.10} parent=0 // pred_check_branch
    %258 = sbr.rel (0) target = $region17
  $region16: #{discriminator_forward.10} parent=0 // pred_region
    _
  $region17: #{discriminator_forward.10} parent=0 // pred_fallthru
    _
  // Predicated region
  $region18: #{discriminator_forward.10} parent=0 // pred_check
    _
  $region19: #{discriminator_forward.10} parent=0 // pred_check_branch
    %260 = sbr.rel (0) target = $region21
  $region20: #{discriminator_forward.10} parent=0 // pred_region
    _
  $region21: #{discriminator_forward.10} parent=0 // pred_fallthru
    _
  // Predicated region
  $region22: #{discriminator_forward.10} parent=0 // pred_check
    _
  $region23: #{discriminator_forward.10} parent=0 // pred_check_branch
    %262 = sbr.rel (0) target = $region25
  $region24: #{discriminator_forward.10} parent=0 // pred_region
    _
  $region25: #{discriminator_forward.10} parent=0 // pred_fallthru
    _

// kernel: discriminator_forward.11
$region0: #{discriminator_forward.11}
  #allocation0 [shape = 'u32[]', space=smem, size = 0x4, offset = 0x4, fixed_abs, tag = 'smem constant byte address 0x4 - core index']
  #allocation1 [shape = 'u32[144,128]{1,0:T(1,128)}', space=vmem, size = 0x12000, scoped, tag = 'internal scratch']
  %s0 = inlined_call_operand.vmem [shape: f32[32,128], index: 0, kind: input, shape index: {}]
  %s1 = inlined_call_operand.vmem [shape: f32[32,1], index: 1, kind: input, shape index: {}]
  %s2 = inlined_call_operand.vmem [shape: f32[32,1], index: 2, kind: input, shape index: {}]
  %s3 = inlined_call_operand.vmem [shape: bf16[32,128], index: 3, kind: output, shape index: {}]
  %s4 = sld [smem:[#allocation0]]
  $region22: #{discriminator_forward.11} parent=0
    _
  %s6 = ssub.s32 1, %s4
  %s7 = scalar_select 0, %s6, %s4
  // Predicated region
  $region2: #{discriminator_forward.11} parent=0 // pred_check
    _
  $region3: #{discriminator_forward.11} parent=0 // pred_check_branch
    %9 = sbr.rel (0) target = $region5
  $region4: #{discriminator_forward.11} parent=0 // pred_region
    _
  $region5: #{discriminator_forward.11} parent=0 // pred_fallthru
    _
  // Predicated region
  $region6: #{discriminator_forward.11} parent=0 // pred_check
    _
  $region7: #{discriminator_forward.11} parent=0 // pred_check_branch
    %11 = sbr.rel (0) target = $region9
  $region8: #{discriminator_forward.11} parent=0 // pred_region
    _
  $region9: #{discriminator_forward.11} parent=0 // pred_fallthru
    _
  // Predicated region
  $region10: #{discriminator_forward.11} parent=0 // pred_check
    _
  $region11: #{discriminator_forward.11} parent=0 // pred_check_branch
    %13 = sbr.rel (0) target = $region13
  $region12: #{discriminator_forward.11} parent=0 // pred_region
    _
  $region13: #{discriminator_forward.11} parent=0 // pred_fallthru
    _
  %v14 = vld [vmem:[%s0] sm:$0xff]
  %v15 = vld [vmem:[%s0 + $0x8] sm:$0xff]
  %v16 = vld [vmem:[%s0 + $0x10] sm:$0xff]
  %v17 = vld [vmem:[%s0 + $0x18] sm:$0xff]
  %v18 = vld [vmem:[%s1] sm:$0xff]
  %v19 = vld [vmem:[%s1 + $0x8] sm:$0xff]
  %v20 = vld [vmem:[%s1 + $0x10] sm:$0xff]
  %v21 = vld [vmem:[%s1 + $0x18] sm:$0xff]
  %23 = vset.pattern.permute.xlu0 0
  %24 = vperm.xlu0 %23, %v18
  %v25 = vpop.permute.xlu0 %24
  %28 = vset.pattern.permute.xlu0 0
  %29 = vperm.xlu0 %28, %v19
  %v30 = vpop.permute.xlu0 %29
  %33 = vset.pattern.permute.xlu0 0
  %34 = vperm.xlu0 %33, %v20
  %v35 = vpop.permute.xlu0 %34
  %38 = vset.pattern.permute.xlu0 0
  %39 = vperm.xlu0 %38, %v21
  %v40 = vpop.permute.xlu0 %39
  %v42 = vmul.f32 %v14, %v25
  %v43 = vmul.f32 %v15, %v30
  %v44 = vmul.f32 %v16, %v35
  %v45 = vmul.f32 %v17, %v40
  %v46 = vld [vmem:[%s2] sm:$0xff]
  %v47 = vld [vmem:[%s2 + $0x8] sm:$0xff]
  %v48 = vld [vmem:[%s2 + $0x10] sm:$0xff]
  %v49 = vld [vmem:[%s2 + $0x18] sm:$0xff]
  %51 = vset.pattern.permute.xlu0 0
  %52 = vperm.xlu0 %51, %v46
  %v53 = vpop.permute.xlu0 %52
  %56 = vset.pattern.permute.xlu0 0
  %57 = vperm.xlu0 %56, %v47
  %v58 = vpop.permute.xlu0 %57
  %61 = vset.pattern.permute.xlu0 0
  %62 = vperm.xlu0 %61, %v48
  %v63 = vpop.permute.xlu0 %62
  %66 = vset.pattern.permute.xlu0 0
  %67 = vperm.xlu0 %66, %v49
  %v68 = vpop.permute.xlu0 %67
  %v70 = vadd.f32 %v42, %v53
  %v71 = vadd.f32 %v43, %v58
  %v72 = vadd.f32 %v44, %v63
  %v73 = vadd.f32 %v45, %v68
  %vm74 = vcmp.gt.f32.partialorder %v70, 0.0
  %vm75 = vcmp.gt.f32.partialorder %v71, 0.0
  %vm76 = vcmp.gt.f32.partialorder %v72, 0.0
  %vm77 = vcmp.gt.f32.partialorder %v73, 0.0
  %v78 = vmul.f32 %v70, 0.2
  %v79 = vmul.f32 %v71, 0.2
  %v80 = vmul.f32 %v72, 0.2
  %v81 = vmul.f32 %v73, 0.2
  %v82 = vsel %vm74, %v70, %v78
  %v83 = vsel %vm75, %v71, %v79
  %v84 = vsel %vm76, %v72, %v80
  %v85 = vsel %vm77, %v73, %v81
  %v86 = vpack.c.bf16 %v83, %v82
  %v87 = vpack.c.bf16 %v85, %v84
  %v90 = vunpack.c.l.b16 %v86
  %v91 = vunpack.c.h.b16 %v86
  %v92 = vunpack.c.l.b16 %v87
  %v93 = vunpack.c.h.b16 %v87
  %v94 = vpack.c.b16 %v90, %v90
  %v95 = vpack.c.b16 %v91, %v91
  %v96 = vpack.c.b16 %v92, %v92
  %v97 = vpack.c.b16 %v93, %v93
  %102 = vst [vmem:[%s3] sm:$0xf] %v94
  %103 = vst [vmem:[%s3 + $0x4] sm:$0xf] %v95
  %104 = vst [vmem:[%s3 + $0x8] sm:$0xf] %v96
  %105 = vst [vmem:[%s3 + $0xc] sm:$0xf] %v97
  // Predicated region
  $region14: #{discriminator_forward.11} parent=0 // pred_check
    _
  $region15: #{discriminator_forward.11} parent=0 // pred_check_branch
    %107 = sbr.rel (0) target = $region17
  $region16: #{discriminator_forward.11} parent=0 // pred_region
    _
  $region17: #{discriminator_forward.11} parent=0 // pred_fallthru
    _
  // Predicated region
  $region18: #{discriminator_forward.11} parent=0 // pred_check
    _
  $region19: #{discriminator_forward.11} parent=0 // pred_check_branch
    %109 = sbr.rel (0) target = $region21
  $region20: #{discriminator_forward.11} parent=0 // pred_region
    _
  $region21: #{discriminator_forward.11} parent=0 // pred_fallthru
    _

// kernel: discriminator_forward.12
$region0: #{discriminator_forward.12}
  #allocation0 [shape = 'u32[]', space=smem, size = 0x4, offset = 0x4, fixed_abs, tag = 'smem constant byte address 0x4 - core index']
  #allocation1 [shape = 'u32[144,128]{1,0:T(1,128)}', space=vmem, size = 0x12000, scoped, tag = 'internal scratch']
  %s0 = inlined_call_operand.vmem [shape: bf16[64,512], index: 0, kind: input, shape index: {}]
  %s1 = inlined_call_operand.vmem [shape: bf16[512,32], index: 1, kind: input, shape index: {}]
  %s2 = inlined_call_operand.vmem [shape: f32[64,32], index: 2, kind: output, shape index: {0}]
  %s3 = inlined_call_operand.vmem [shape: f32[1,64,128], index: 3, kind: output, shape index: {1}]
  %4 = xla_tuple %s2, %s3
  %s5 = sld [smem:[#allocation0]]
  $region26: #{discriminator_forward.12} parent=0
    _
  %s7 = ssub.s32 1, %s5
  %s8 = scalar_select 0, %s7, %s5
  // Predicated region
  $region2: #{discriminator_forward.12} parent=0 // pred_check
    _
  $region3: #{discriminator_forward.12} parent=0 // pred_check_branch
    %10 = sbr.rel (0) target = $region5
  $region4: #{discriminator_forward.12} parent=0 // pred_region
    _
  $region5: #{discriminator_forward.12} parent=0 // pred_fallthru
    _
  // Predicated region
  $region6: #{discriminator_forward.12} parent=0 // pred_check
    _
  $region7: #{discriminator_forward.12} parent=0 // pred_check_branch
    %12 = sbr.rel (0) target = $region9
  $region8: #{discriminator_forward.12} parent=0 // pred_region
    _
  $region9: #{discriminator_forward.12} parent=0 // pred_fallthru
    _
  %v14 = vld [vmem:[%s0] sm:$0xff]
  %v15 = vld [vmem:[%s0 + $0x8] sm:$0xff]
  %v16 = vld [vmem:[%s0 + $0x10] sm:$0xff]
  %v17 = vld [vmem:[%s0 + $0x18] sm:$0xff]
  %v18 = vld [vmem:[%s0 + $0x20] sm:$0xff]
  %v19 = vld [vmem:[%s0 + $0x28] sm:$0xff]
  %v20 = vld [vmem:[%s0 + $0x30] sm:$0xff]
  %v21 = vld [vmem:[%s0 + $0x38] sm:$0xff]
  %v22 = vld [vmem:[%s0 + $0x40] sm:$0xff]
  %v23 = vld [vmem:[%s0 + $0x48] sm:$0xff]
  %v24 = vld [vmem:[%s0 + $0x50] sm:$0xff]
  %v25 = vld [vmem:[%s0 + $0x58] sm:$0xff]
  %v26 = vld [vmem:[%s0 + $0x60] sm:$0xff]
  %v27 = vld [vmem:[%s0 + $0x68] sm:$0xff]
  %v28 = vld [vmem:[%s0 + $0x70] sm:$0xff]
  %v29 = vld [vmem:[%s0 + $0x78] sm:$0xff]
  %v30 = vld [vmem:[%s1] sm:$0xf]
  %v31 = vld [vmem:[%s1 + $0x4] sm:$0xf]
  %v32 = vld [vmem:[%s1 + $0x8] sm:$0xf]
  %v33 = vld [vmem:[%s1 + $0xc] sm:$0xf]
  %v34 = vld [vmem:[%s1 + $0x10] sm:$0xf]
  %v35 = vld [vmem:[%s1 + $0x14] sm:$0xf]
  %v36 = vld [vmem:[%s1 + $0x18] sm:$0xf]
  %v37 = vld [vmem:[%s1 + $0x1c] sm:$0xf]
  %v38 = vld [vmem:[%s1 + $0x20] sm:$0xf]
  %v39 = vld [vmem:[%s1 + $0x24] sm:$0xf]
  %v40 = vld [vmem:[%s1 + $0x28] sm:$0xf]
  %v41 = vld [vmem:[%s1 + $0x2c] sm:$0xf]
  %v42 = vld [vmem:[%s1 + $0x30] sm:$0xf]
  %v43 = vld [vmem:[%s1 + $0x34] sm:$0xf]
  %v44 = vld [vmem:[%s1 + $0x38] sm:$0xf]
  %v45 = vld [vmem:[%s1 + $0x3c] sm:$0xf]
  %v46 = vld [vmem:[%s1 + $0x40] sm:$0xf]
  %v47 = vld [vmem:[%s1 + $0x44] sm:$0xf]
  %v48 = vld [vmem:[%s1 + $0x48] sm:$0xf]
  %v49 = vld [vmem:[%s1 + $0x4c] sm:$0xf]
  %v50 = vld [vmem:[%s1 + $0x50] sm:$0xf]
  %v51 = vld [vmem:[%s1 + $0x54] sm:$0xf]
  %v52 = vld [vmem:[%s1 + $0x58] sm:$0xf]
  %v53 = vld [vmem:[%s1 + $0x5c] sm:$0xf]
  %v54 = vld [vmem:[%s1 + $0x60] sm:$0xf]
  %v55 = vld [vmem:[%s1 + $0x64] sm:$0xf]
  %v56 = vld [vmem:[%s1 + $0x68] sm:$0xf]
  %v57 = vld [vmem:[%s1 + $0x6c] sm:$0xf]
  %v58 = vld [vmem:[%s1 + $0x70] sm:$0xf]
  %v59 = vld [vmem:[%s1 + $0x74] sm:$0xf]
  %v60 = vld [vmem:[%s1 + $0x78] sm:$0xf]
  %v61 = vld [vmem:[%s1 + $0x7c] sm:$0xf]
  %v62 = vld [vmem:[%s1 + $0x80] sm:$0xf]
  %v63 = vld [vmem:[%s1 + $0x84] sm:$0xf]
  %v64 = vld [vmem:[%s1 + $0x88] sm:$0xf]
  %v65 = vld [vmem:[%s1 + $0x8c] sm:$0xf]
  %v66 = vld [vmem:[%s1 + $0x90] sm:$0xf]
  %v67 = vld [vmem:[%s1 + $0x94] sm:$0xf]
  %v68 = vld [vmem:[%s1 + $0x98] sm:$0xf]
  %v69 = vld [vmem:[%s1 + $0x9c] sm:$0xf]
  %v70 = vld [vmem:[%s1 + $0xa0] sm:$0xf]
  %v71 = vld [vmem:[%s1 + $0xa4] sm:$0xf]
  %v72 = vld [vmem:[%s1 + $0xa8] sm:$0xf]
  %v73 = vld [vmem:[%s1 + $0xac] sm:$0xf]
  %v74 = vld [vmem:[%s1 + $0xb0] sm:$0xf]
  %v75 = vld [vmem:[%s1 + $0xb4] sm:$0xf]
  %v76 = vld [vmem:[%s1 + $0xb8] sm:$0xf]
  %v77 = vld [vmem:[%s1 + $0xbc] sm:$0xf]
  %v78 = vld [vmem:[%s1 + $0xc0] sm:$0xf]
  %v79 = vld [vmem:[%s1 + $0xc4] sm:$0xf]
  %v80 = vld [vmem:[%s1 + $0xc8] sm:$0xf]
  %v81 = vld [vmem:[%s1 + $0xcc] sm:$0xf]
  %v82 = vld [vmem:[%s1 + $0xd0] sm:$0xf]
  %v83 = vld [vmem:[%s1 + $0xd4] sm:$0xf]
  %v84 = vld [vmem:[%s1 + $0xd8] sm:$0xf]
  %v85 = vld [vmem:[%s1 + $0xdc] sm:$0xf]
  %v86 = vld [vmem:[%s1 + $0xe0] sm:$0xf]
  %v87 = vld [vmem:[%s1 + $0xe4] sm:$0xf]
  %v88 = vld [vmem:[%s1 + $0xe8] sm:$0xf]
  %v89 = vld [vmem:[%s1 + $0xec] sm:$0xf]
  %v90 = vld [vmem:[%s1 + $0xf0] sm:$0xf]
  %v91 = vld [vmem:[%s1 + $0xf4] sm:$0xf]
  %v92 = vld [vmem:[%s1 + $0xf8] sm:$0xf]
  %v93 = vld [vmem:[%s1 + $0xfc] sm:$0xf]
  %v110 = vunpack.c.l.b16 %v14
  %v111 = vunpack.c.h.b16 %v14
  %v112 = vunpack.c.l.b16 %v15
  %v113 = vunpack.c.h.b16 %v15
  %v114 = vunpack.c.l.b16 %v16
  %v115 = vunpack.c.h.b16 %v16
  %v116 = vunpack.c.l.b16 %v17
  %v117 = vunpack.c.h.b16 %v17
  %v118 = vunpack.c.l.b16 %v18
  %v119 = vunpack.c.h.b16 %v18
  %v120 = vunpack.c.l.b16 %v19
  %v121 = vunpack.c.h.b16 %v19
  %v122 = vunpack.c.l.b16 %v20
  %v123 = vunpack.c.h.b16 %v20
  %v124 = vunpack.c.l.b16 %v21
  %v125 = vunpack.c.h.b16 %v21
  %v126 = vunpack.c.l.b16 %v22
  %v127 = vunpack.c.h.b16 %v22
  %v128 = vunpack.c.l.b16 %v23
  %v129 = vunpack.c.h.b16 %v23
  %v130 = vunpack.c.l.b16 %v24
  %v131 = vunpack.c.h.b16 %v24
  %v132 = vunpack.c.l.b16 %v25
  %v133 = vunpack.c.h.b16 %v25
  %v134 = vunpack.c.l.b16 %v26
  %v135 = vunpack.c.h.b16 %v26
  %v136 = vunpack.c.l.b16 %v27
  %v137 = vunpack.c.h.b16 %v27
  %v138 = vunpack.c.l.b16 %v28
  %v139 = vunpack.c.h.b16 %v28
  %v140 = vunpack.c.l.b16 %v29
  %v141 = vunpack.c.h.b16 %v29
  %v142 = vpack.c.b16 %v114, %v110
  %v143 = vpack.c.b16 %v115, %v111
  %v144 = vpack.c.b16 %v116, %v112
  %v145 = vpack.c.b16 %v117, %v113
  %v146 = vpack.c.b16 %v122, %v118
  %v147 = vpack.c.b16 %v123, %v119
  %v148 = vpack.c.b16 %v124, %v120
  %v149 = vpack.c.b16 %v125, %v121
  %v150 = vpack.c.b16 %v130, %v126
  %v151 = vpack.c.b16 %v131, %v127
  %v152 = vpack.c.b16 %v132, %v128
  %v153 = vpack.c.b16 %v133, %v129
  %v154 = vpack.c.b16 %v138, %v134
  %v155 = vpack.c.b16 %v139, %v135
  %v156 = vpack.c.b16 %v140, %v136
  %v157 = vpack.c.b16 %v141, %v137
  %v238 = vunpack.c.l.b16 %v30
  %v239 = vunpack.c.l.b16 %v31
  %v240 = vunpack.c.l.b16 %v32
  %v241 = vunpack.c.l.b16 %v33
  %v242 = vunpack.c.l.b16 %v34
  %v243 = vunpack.c.l.b16 %v35
  %v244 = vunpack.c.l.b16 %v36
  %v245 = vunpack.c.l.b16 %v37
  %v246 = vunpack.c.l.b16 %v38
  %v247 = vunpack.c.l.b16 %v39
  %v248 = vunpack.c.l.b16 %v40
  %v249 = vunpack.c.l.b16 %v41
  %v250 = vunpack.c.l.b16 %v42
  %v251 = vunpack.c.l.b16 %v43
  %v252 = vunpack.c.l.b16 %v44
  %v253 = vunpack.c.l.b16 %v45
  %v254 = vunpack.c.l.b16 %v46
  %v255 = vunpack.c.l.b16 %v47
  %v256 = vunpack.c.l.b16 %v48
  %v257 = vunpack.c.l.b16 %v49
  %v258 = vunpack.c.l.b16 %v50
  %v259 = vunpack.c.l.b16 %v51
  %v260 = vunpack.c.l.b16 %v52
  %v261 = vunpack.c.l.b16 %v53
  %v262 = vunpack.c.l.b16 %v54
  %v263 = vunpack.c.l.b16 %v55
  %v264 = vunpack.c.l.b16 %v56
  %v265 = vunpack.c.l.b16 %v57
  %v266 = vunpack.c.l.b16 %v58
  %v267 = vunpack.c.l.b16 %v59
  %v268 = vunpack.c.l.b16 %v60
  %v269 = vunpack.c.l.b16 %v61
  %v270 = vunpack.c.l.b16 %v62
  %v271 = vunpack.c.l.b16 %v63
  %v272 = vunpack.c.l.b16 %v64
  %v273 = vunpack.c.l.b16 %v65
  %v274 = vunpack.c.l.b16 %v66
  %v275 = vunpack.c.l.b16 %v67
  %v276 = vunpack.c.l.b16 %v68
  %v277 = vunpack.c.l.b16 %v69
  %v278 = vunpack.c.l.b16 %v70
  %v279 = vunpack.c.l.b16 %v71
  %v280 = vunpack.c.l.b16 %v72
  %v281 = vunpack.c.l.b16 %v73
  %v282 = vunpack.c.l.b16 %v74
  %v283 = vunpack.c.l.b16 %v75
  %v284 = vunpack.c.l.b16 %v76
  %v285 = vunpack.c.l.b16 %v77
  %v286 = vunpack.c.l.b16 %v78
  %v287 = vunpack.c.l.b16 %v79
  %v288 = vunpack.c.l.b16 %v80
  %v289 = vunpack.c.l.b16 %v81
  %v290 = vunpack.c.l.b16 %v82
  %v291 = vunpack.c.l.b16 %v83
  %v292 = vunpack.c.l.b16 %v84
  %v293 = vunpack.c.l.b16 %v85
  %v294 = vunpack.c.l.b16 %v86
  %v295 = vunpack.c.l.b16 %v87
  %v296 = vunpack.c.l.b16 %v88
  %v297 = vunpack.c.l.b16 %v89
  %v298 = vunpack.c.l.b16 %v90
  %v299 = vunpack.c.l.b16 %v91
  %v300 = vunpack.c.l.b16 %v92
  %v301 = vunpack.c.l.b16 %v93
  %v302 = vpack.c.b16 %v239, %v238
  %v303 = vpack.c.b16 %v241, %v240
  %v304 = vpack.c.b16 %v243, %v242
  %v305 = vpack.c.b16 %v245, %v244
  %v306 = vpack.c.b16 %v247, %v246
  %v307 = vpack.c.b16 %v249, %v248
  %v308 = vpack.c.b16 %v251, %v250
  %v309 = vpack.c.b16 %v253, %v252
  %v310 = vpack.c.b16 %v255, %v254
  %v311 = vpack.c.b16 %v257, %v256
  %v312 = vpack.c.b16 %v259, %v258
  %v313 = vpack.c.b16 %v261, %v260
  %v314 = vpack.c.b16 %v263, %v262
  %v315 = vpack.c.b16 %v265, %v264
  %v316 = vpack.c.b16 %v267, %v266
  %v317 = vpack.c.b16 %v269, %v268
  %v318 = vpack.c.b16 %v271, %v270
  %v319 = vpack.c.b16 %v273, %v272
  %v320 = vpack.c.b16 %v275, %v274
  %v321 = vpack.c.b16 %v277, %v276
  %v322 = vpack.c.b16 %v279, %v278
  %v323 = vpack.c.b16 %v281, %v280
  %v324 = vpack.c.b16 %v283, %v282
  %v325 = vpack.c.b16 %v285, %v284
  %v326 = vpack.c.b16 %v287, %v286
  %v327 = vpack.c.b16 %v289, %v288
  %v328 = vpack.c.b16 %v291, %v290
  %v329 = vpack.c.b16 %v293, %v292
  %v330 = vpack.c.b16 %v295, %v294
  %v331 = vpack.c.b16 %v297, %v296
  %v332 = vpack.c.b16 %v299, %v298
  %v333 = vpack.c.b16 %v301, %v300
  %366 = vmatprep.subr.bf16.mxu0 0
  %367 = vmatpush1.bf16.msra.mxu0 %v302
  %368 = vmatprep.subr.bf16.mxu0 0
  %369 = vmatpush1.bf16.msra.mxu0 %v303
  %370 = vmatprep.subr.bf16.mxu0 0
  %371 = vmatpush1.bf16.msra.mxu0 %v304
  %372 = vmatprep.subr.bf16.mxu0 0
  %373 = vmatpush1.bf16.msra.mxu0 %v305
  %374 = vmatprep.subr.bf16.mxu0 0
  %375 = vmatpush1.bf16.msra.mxu0 %v306
  %376 = vmatprep.subr.bf16.mxu0 0
  %377 = vmatpush1.bf16.msra.mxu0 %v307
  %378 = vmatprep.subr.bf16.mxu0 0
  %379 = vmatpush1.bf16.msra.mxu0 %v308
  %380 = vmatprep.subr.bf16.mxu0 0
  %381 = vmatpush1.bf16.msra.mxu0 %v309
  %382 = vmatprep.subr.bf16.mxu0 0
  %383 = vmatpush1.bf16.msra.mxu0 %v310
  %384 = vmatprep.subr.bf16.mxu0 0
  %385 = vmatpush1.bf16.msra.mxu0 %v311
  %386 = vmatprep.subr.bf16.mxu0 0
  %387 = vmatpush1.bf16.msra.mxu0 %v312
  %388 = vmatprep.subr.bf16.mxu0 0
  %389 = vmatpush1.bf16.msra.mxu0 %v313
  %390 = vmatprep.subr.bf16.mxu0 0
  %391 = vmatpush1.bf16.msra.mxu0 %v314
  %392 = vmatprep.subr.bf16.mxu0 0
  %393 = vmatpush1.bf16.msra.mxu0 %v315
  %394 = vmatprep.subr.bf16.mxu0 0
  %395 = vmatpush1.bf16.msra.mxu0 %v316
  %396 = vmatprep.subr.bf16.mxu0 0
  %397 = vmatpush1.bf16.msra.mxu0 %v317
  %398 = vmatprep.mubr.bf16.mxu0 %v143
  %399 = vmatmul.mubr.bf16.gmra.mrb[0].mxu0 %v142
  %v400 = vpop.f32.mrb[0].mxu0
  %v401 = vadd.f32 0.0, %v400
  %v402 = vpop.f32.mrb[0].mxu0
  %v403 = vpop.f32.mrb[0].mxu0
  %v404 = vadd.f32 0.0, %v403
  %v405 = vpop.f32.mrb[0].mxu0
  %406 = vmatprep.mubr.bf16.mxu0 %v147
  %407 = vmatmul.mubr.bf16.gmra.mrb[0].mxu0 %v146
  %v408 = vpop.f32.mrb[0].mxu0
  %v409 = vadd.f32 0.0, %v408
  %v410 = vpop.f32.mrb[0].mxu0
  %v411 = vpop.f32.mrb[0].mxu0
  %v412 = vadd.f32 0.0, %v411
  %v413 = vpop.f32.mrb[0].mxu0
  %414 = vmatprep.mubr.bf16.mxu0 %v151
  %415 = vmatmul.mubr.bf16.gmra.mrb[0].mxu0 %v150
  %v416 = vpop.f32.mrb[0].mxu0
  %v417 = vadd.f32 0.0, %v416
  %v418 = vpop.f32.mrb[0].mxu0
  %v419 = vpop.f32.mrb[0].mxu0
  %v420 = vadd.f32 0.0, %v419
  %v421 = vpop.f32.mrb[0].mxu0
  %422 = vmatprep.mubr.bf16.mxu0 %v155
  %423 = vmatmul.mubr.bf16.gmra.mrb[0].mxu0 %v154
  %v424 = vpop.f32.mrb[0].mxu0
  %v425 = vadd.f32 0.0, %v424
  %v426 = vpop.f32.mrb[0].mxu0
  %v427 = vpop.f32.mrb[0].mxu0
  %v428 = vadd.f32 0.0, %v427
  %v429 = vpop.f32.mrb[0].mxu0
  %430 = vdwg.mxu0
  %431 = vmatprep.subr.bf16.mxu0 0
  %432 = vmatpush1.bf16.msra.mxu0 %v318
  %433 = vmatprep.subr.bf16.mxu0 0
  %434 = vmatpush1.bf16.msra.mxu0 %v319
  %435 = vmatprep.subr.bf16.mxu0 0
  %436 = vmatpush1.bf16.msra.mxu0 %v320
  %437 = vmatprep.subr.bf16.mxu0 0
  %438 = vmatpush1.bf16.msra.mxu0 %v321
  %439 = vmatprep.subr.bf16.mxu0 0
  %440 = vmatpush1.bf16.msra.mxu0 %v322
  %441 = vmatprep.subr.bf16.mxu0 0
  %442 = vmatpush1.bf16.msra.mxu0 %v323
  %443 = vmatprep.subr.bf16.mxu0 0
  %444 = vmatpush1.bf16.msra.mxu0 %v324
  %445 = vmatprep.subr.bf16.mxu0 0
  %446 = vmatpush1.bf16.msra.mxu0 %v325
  %447 = vmatprep.subr.bf16.mxu0 0
  %448 = vmatpush1.bf16.msra.mxu0 %v326
  %449 = vmatprep.subr.bf16.mxu0 0
  %450 = vmatpush1.bf16.msra.mxu0 %v327
  %451 = vmatprep.subr.bf16.mxu0 0
  %452 = vmatpush1.bf16.msra.mxu0 %v328
  %453 = vmatprep.subr.bf16.mxu0 0
  %454 = vmatpush1.bf16.msra.mxu0 %v329
  %455 = vmatprep.subr.bf16.mxu0 0
  %456 = vmatpush1.bf16.msra.mxu0 %v330
  %457 = vmatprep.subr.bf16.mxu0 0
  %458 = vmatpush1.bf16.msra.mxu0 %v331
  %459 = vmatprep.subr.bf16.mxu0 0
  %460 = vmatpush1.bf16.msra.mxu0 %v332
  %461 = vmatprep.subr.bf16.mxu0 0
  %462 = vmatpush1.bf16.msra.mxu0 %v333
  %463 = vmatprep.mubr.bf16.mxu0 %v145
  %464 = vmatmul.mubr.bf16.gmra.mrb[0].mxu0 %v144
  %v465 = vpop.f32.mrb[0].mxu0
  %v466 = vadd.f32 %v401, %v465
  %v467 = vpop.f32.mrb[0].mxu0
  %v468 = vpop.f32.mrb[0].mxu0
  %v469 = vadd.f32 %v404, %v468
  %v470 = vpop.f32.mrb[0].mxu0
  %471 = vmatprep.mubr.bf16.mxu0 %v149
  %472 = vmatmul.mubr.bf16.gmra.mrb[0].mxu0 %v148
  %v473 = vpop.f32.mrb[0].mxu0
  %v474 = vadd.f32 %v409, %v473
  %v475 = vpop.f32.mrb[0].mxu0
  %v476 = vpop.f32.mrb[0].mxu0
  %v477 = vadd.f32 %v412, %v476
  %v478 = vpop.f32.mrb[0].mxu0
  %479 = vmatprep.mubr.bf16.mxu0 %v153
  %480 = vmatmul.mubr.bf16.gmra.mrb[0].mxu0 %v152
  %v481 = vpop.f32.mrb[0].mxu0
  %v482 = vadd.f32 %v417, %v481
  %v483 = vpop.f32.mrb[0].mxu0
  %v484 = vpop.f32.mrb[0].mxu0
  %v485 = vadd.f32 %v420, %v484
  %v486 = vpop.f32.mrb[0].mxu0
  %487 = vmatprep.mubr.bf16.mxu0 %v157
  %488 = vmatmul.mubr.bf16.gmra.mrb[0].mxu0 %v156
  %v489 = vpop.f32.mrb[0].mxu0
  %v490 = vadd.f32 %v425, %v489
  %v491 = vpop.f32.mrb[0].mxu0
  %v492 = vpop.f32.mrb[0].mxu0
  %v493 = vadd.f32 %v428, %v492
  %v494 = vpop.f32.mrb[0].mxu0
  %495 = vdwg.mxu0
  %vm496 = vcmask 261120
  %497 = vst.msk [vmem:[%s2] sm:$0xff] %vm496, %v466
  %498 = vst.msk [vmem:[%s2 + $0x8] sm:$0xff] %vm496, %v469
  %499 = vst.msk [vmem:[%s2 + $0x10] sm:$0xff] %vm496, %v474
  %500 = vst.msk [vmem:[%s2 + $0x18] sm:$0xff] %vm496, %v477
  %501 = vst.msk [vmem:[%s2 + $0x20] sm:$0xff] %vm496, %v482
  %502 = vst.msk [vmem:[%s2 + $0x28] sm:$0xff] %vm496, %v485
  %503 = vst.msk [vmem:[%s2 + $0x30] sm:$0xff] %vm496, %v490
  %504 = vst.msk [vmem:[%s2 + $0x38] sm:$0xff] %vm496, %v493
  %v505 = vsel %vm496, %v466, 0.0
  %506 = vadd.xlane.f32.xlu0 %v505
  %v507 = vpop.xlane.xlu0 %506
  %v508 = vsel %vm496, %v469, 0.0
  %509 = vadd.xlane.f32.xlu0 %v508
  %v510 = vpop.xlane.xlu0 %509
  %v511 = vsel %vm496, %v474, 0.0
  %512 = vadd.xlane.f32.xlu0 %v511
  %v513 = vpop.xlane.xlu0 %512
  %v514 = vsel %vm496, %v477, 0.0
  %515 = vadd.xlane.f32.xlu0 %v514
  %v516 = vpop.xlane.xlu0 %515
  %v517 = vsel %vm496, %v482, 0.0
  %518 = vadd.xlane.f32.xlu0 %v517
  %v519 = vpop.xlane.xlu0 %518
  %v520 = vsel %vm496, %v485, 0.0
  %521 = vadd.xlane.f32.xlu0 %v520
  %v522 = vpop.xlane.xlu0 %521
  %v523 = vsel %vm496, %v490, 0.0
  %524 = vadd.xlane.f32.xlu0 %v523
  %v525 = vpop.xlane.xlu0 %524
  %v526 = vsel %vm496, %v493, 0.0
  %527 = vadd.xlane.f32.xlu0 %v526
  %v528 = vpop.xlane.xlu0 %527
  %v529 = vmul.f32 %v466, %v466
  %v530 = vmul.f32 %v469, %v469
  %v531 = vmul.f32 %v474, %v474
  %v532 = vmul.f32 %v477, %v477
  %v533 = vmul.f32 %v482, %v482
  %v534 = vmul.f32 %v485, %v485
  %v535 = vmul.f32 %v490, %v490
  %v536 = vmul.f32 %v493, %v493
  %v537 = vsel %vm496, %v529, 0.0
  %538 = vadd.xlane.f32.xlu0 %v537
  %v539 = vpop.xlane.xlu0 %538
  %v540 = vsel %vm496, %v530, 0.0
  %541 = vadd.xlane.f32.xlu0 %v540
  %v542 = vpop.xlane.xlu0 %541
  %v543 = vsel %vm496, %v531, 0.0
  %544 = vadd.xlane.f32.xlu0 %v543
  %v545 = vpop.xlane.xlu0 %544
  %v546 = vsel %vm496, %v532, 0.0
  %547 = vadd.xlane.f32.xlu0 %v546
  %v548 = vpop.xlane.xlu0 %547
  %v549 = vsel %vm496, %v533, 0.0
  %550 = vadd.xlane.f32.xlu0 %v549
  %v551 = vpop.xlane.xlu0 %550
  %v552 = vsel %vm496, %v534, 0.0
  %553 = vadd.xlane.f32.xlu0 %v552
  %v554 = vpop.xlane.xlu0 %553
  %v555 = vsel %vm496, %v535, 0.0
  %556 = vadd.xlane.f32.xlu0 %v555
  %v557 = vpop.xlane.xlu0 %556
  %v558 = vsel %vm496, %v536, 0.0
  %559 = vadd.xlane.f32.xlu0 %v558
  %v560 = vpop.xlane.xlu0 %559
  %v561 = vlaneseq
  %v562 = vand.u32 %v561, 127
  %vm563 = vcmp.eq.s32.totalorder %v562, 0
  %vm564 = vcmp.eq.s32.totalorder %v562, 1
  %v565 = vsel %vm564, %v539, 0.0
  %v566 = vsel %vm564, %v542, 0.0
  %v567 = vsel %vm564, %v545, 0.0
  %v568 = vsel %vm564, %v548, 0.0
  %v569 = vsel %vm564, %v551, 0.0
  %v570 = vsel %vm564, %v554, 0.0
  %v571 = vsel %vm564, %v557, 0.0
  %v572 = vsel %vm564, %v560, 0.0
  %v573 = vsel %vm563, %v507, %v565
  %v574 = vsel %vm563, %v510, %v566
  %v575 = vsel %vm563, %v513, %v567
  %v576 = vsel %vm563, %v516, %v568
  %v577 = vsel %vm563, %v519, %v569
  %v578 = vsel %vm563, %v522, %v570
  %v579 = vsel %vm563, %v525, %v571
  %v580 = vsel %vm563, %v528, %v572
  %581 = vst [vmem:[%s3] sm:$0xff] %v573
  %582 = vst [vmem:[%s3 + $0x8] sm:$0xff] %v574
  %583 = vst [vmem:[%s3 + $0x10] sm:$0xff] %v575
  %584 = vst [vmem:[%s3 + $0x18] sm:$0xff] %v576
  %585 = vst [vmem:[%s3 + $0x20] sm:$0xff] %v577
  %586 = vst [vmem:[%s3 + $0x28] sm:$0xff] %v578
  %587 = vst [vmem:[%s3 + $0x30] sm:$0xff] %v579
  %588 = vst [vmem:[%s3 + $0x38] sm:$0xff] %v580
  // Predicated region
  $region10: #{discriminator_forward.12} parent=0 // pred_check
    _
  $region11: #{discriminator_forward.12} parent=0 // pred_check_branch
    %590 = sbr.rel (0) target = $region13
  $region12: #{discriminator_forward.12} parent=0 // pred_region
    _
  $region13: #{discriminator_forward.12} parent=0 // pred_fallthru
    _
  // Predicated region
  $region14: #{discriminator_forward.12} parent=0 // pred_check
    _
  $region15: #{discriminator_forward.12} parent=0 // pred_check_branch
    %592 = sbr.rel (0) target = $region17
  $region16: #{discriminator_forward.12} parent=0 // pred_region
    _
  $region17: #{discriminator_forward.12} parent=0 // pred_fallthru
    _
  // Predicated region
  $region18: #{discriminator_forward.12} parent=0 // pred_check
    _
  $region19: #{discriminator_forward.12} parent=0 // pred_check_branch
    %594 = sbr.rel (0) target = $region21
  $region20: #{discriminator_forward.12} parent=0 // pred_region
    _
  $region21: #{discriminator_forward.12} parent=0 // pred_fallthru
    _
  // Predicated region
  $region22: #{discriminator_forward.12} parent=0 // pred_check
    _
  $region23: #{discriminator_forward.12} parent=0 // pred_check_branch
    %596 = sbr.rel (0) target = $region25
  $region24: #{discriminator_forward.12} parent=0 // pred_region
    _
  $region25: #{discriminator_forward.12} parent=0 // pred_fallthru
    _

// kernel: discriminator_forward.13
$region0: #{discriminator_forward.13}
  #allocation0 [shape = 'u32[]', space=smem, size = 0x4, offset = 0x4, fixed_abs, tag = 'smem constant byte address 0x4 - core index']
  #allocation1 [shape = 'u32[144,128]{1,0:T(1,128)}', space=vmem, size = 0x12000, scoped, tag = 'internal scratch']
  %s0 = inlined_call_operand.vmem [shape: f32[64,32], index: 0, kind: input, shape index: {}]
  %s1 = inlined_call_operand.vmem [shape: f32[64,1], index: 1, kind: input, shape index: {}]
  %s2 = inlined_call_operand.vmem [shape: f32[64,1], index: 2, kind: input, shape index: {}]
  %s3 = inlined_call_operand.vmem [shape: bf16[64,32], index: 3, kind: output, shape index: {}]
  %s4 = sld [smem:[#allocation0]]
  $region22: #{discriminator_forward.13} parent=0
    _
  %s6 = ssub.s32 1, %s4
  %s7 = scalar_select 0, %s6, %s4
  // Predicated region
  $region2: #{discriminator_forward.13} parent=0 // pred_check
    _
  $region3: #{discriminator_forward.13} parent=0 // pred_check_branch
    %9 = sbr.rel (0) target = $region5
  $region4: #{discriminator_forward.13} parent=0 // pred_region
    _
  $region5: #{discriminator_forward.13} parent=0 // pred_fallthru
    _
  // Predicated region
  $region6: #{discriminator_forward.13} parent=0 // pred_check
    _
  $region7: #{discriminator_forward.13} parent=0 // pred_check_branch
    %11 = sbr.rel (0) target = $region9
  $region8: #{discriminator_forward.13} parent=0 // pred_region
    _
  $region9: #{discriminator_forward.13} parent=0 // pred_fallthru
    _
  // Predicated region
  $region10: #{discriminator_forward.13} parent=0 // pred_check
    _
  $region11: #{discriminator_forward.13} parent=0 // pred_check_branch
    %13 = sbr.rel (0) target = $region13
  $region12: #{discriminator_forward.13} parent=0 // pred_region
    _
  $region13: #{discriminator_forward.13} parent=0 // pred_fallthru
    _
  %v14 = vld [vmem:[%s0] sm:$0xff]
  %v15 = vld [vmem:[%s0 + $0x8] sm:$0xff]
  %v16 = vld [vmem:[%s0 + $0x10] sm:$0xff]
  %v17 = vld [vmem:[%s0 + $0x18] sm:$0xff]
  %v18 = vld [vmem:[%s0 + $0x20] sm:$0xff]
  %v19 = vld [vmem:[%s0 + $0x28] sm:$0xff]
  %v20 = vld [vmem:[%s0 + $0x30] sm:$0xff]
  %v21 = vld [vmem:[%s0 + $0x38] sm:$0xff]
  %v22 = vld [vmem:[%s1] sm:$0xff]
  %v23 = vld [vmem:[%s1 + $0x8] sm:$0xff]
  %v24 = vld [vmem:[%s1 + $0x10] sm:$0xff]
  %v25 = vld [vmem:[%s1 + $0x18] sm:$0xff]
  %v26 = vld [vmem:[%s1 + $0x20] sm:$0xff]
  %v27 = vld [vmem:[%s1 + $0x28] sm:$0xff]
  %v28 = vld [vmem:[%s1 + $0x30] sm:$0xff]
  %v29 = vld [vmem:[%s1 + $0x38] sm:$0xff]
  %31 = vset.pattern.permute.xlu0 0
  %32 = vperm.xlu0 %31, %v22
  %v33 = vpop.permute.xlu0 %32
  %36 = vset.pattern.permute.xlu0 0
  %37 = vperm.xlu0 %36, %v23
  %v38 = vpop.permute.xlu0 %37
  %41 = vset.pattern.permute.xlu0 0
  %42 = vperm.xlu0 %41, %v24
  %v43 = vpop.permute.xlu0 %42
  %46 = vset.pattern.permute.xlu0 0
  %47 = vperm.xlu0 %46, %v25
  %v48 = vpop.permute.xlu0 %47
  %51 = vset.pattern.permute.xlu0 0
  %52 = vperm.xlu0 %51, %v26
  %v53 = vpop.permute.xlu0 %52
  %56 = vset.pattern.permute.xlu0 0
  %57 = vperm.xlu0 %56, %v27
  %v58 = vpop.permute.xlu0 %57
  %61 = vset.pattern.permute.xlu0 0
  %62 = vperm.xlu0 %61, %v28
  %v63 = vpop.permute.xlu0 %62
  %66 = vset.pattern.permute.xlu0 0
  %67 = vperm.xlu0 %66, %v29
  %v68 = vpop.permute.xlu0 %67
  %v70 = vmul.f32 %v14, %v33
  %v71 = vmul.f32 %v15, %v38
  %v72 = vmul.f32 %v16, %v43
  %v73 = vmul.f32 %v17, %v48
  %v74 = vmul.f32 %v18, %v53
  %v75 = vmul.f32 %v19, %v58
  %v76 = vmul.f32 %v20, %v63
  %v77 = vmul.f32 %v21, %v68
  %v78 = vld [vmem:[%s2] sm:$0xff]
  %v79 = vld [vmem:[%s2 + $0x8] sm:$0xff]
  %v80 = vld [vmem:[%s2 + $0x10] sm:$0xff]
  %v81 = vld [vmem:[%s2 + $0x18] sm:$0xff]
  %v82 = vld [vmem:[%s2 + $0x20] sm:$0xff]
  %v83 = vld [vmem:[%s2 + $0x28] sm:$0xff]
  %v84 = vld [vmem:[%s2 + $0x30] sm:$0xff]
  %v85 = vld [vmem:[%s2 + $0x38] sm:$0xff]
  %87 = vset.pattern.permute.xlu0 0
  %88 = vperm.xlu0 %87, %v78
  %v89 = vpop.permute.xlu0 %88
  %92 = vset.pattern.permute.xlu0 0
  %93 = vperm.xlu0 %92, %v79
  %v94 = vpop.permute.xlu0 %93
  %97 = vset.pattern.permute.xlu0 0
  %98 = vperm.xlu0 %97, %v80
  %v99 = vpop.permute.xlu0 %98
  %102 = vset.pattern.permute.xlu0 0
  %103 = vperm.xlu0 %102, %v81
  %v104 = vpop.permute.xlu0 %103
  %107 = vset.pattern.permute.xlu0 0
  %108 = vperm.xlu0 %107, %v82
  %v109 = vpop.permute.xlu0 %108
  %112 = vset.pattern.permute.xlu0 0
  %113 = vperm.xlu0 %112, %v83
  %v114 = vpop.permute.xlu0 %113
  %117 = vset.pattern.permute.xlu0 0
  %118 = vperm.xlu0 %117, %v84
  %v119 = vpop.permute.xlu0 %118
  %122 = vset.pattern.permute.xlu0 0
  %123 = vperm.xlu0 %122, %v85
  %v124 = vpop.permute.xlu0 %123
  %v126 = vadd.f32 %v70, %v89
  %v127 = vadd.f32 %v71, %v94
  %v128 = vadd.f32 %v72, %v99
  %v129 = vadd.f32 %v73, %v104
  %v130 = vadd.f32 %v74, %v109
  %v131 = vadd.f32 %v75, %v114
  %v132 = vadd.f32 %v76, %v119
  %v133 = vadd.f32 %v77, %v124
  %vm134 = vcmp.gt.f32.partialorder %v126, 0.0
  %vm135 = vcmp.gt.f32.partialorder %v127, 0.0
  %vm136 = vcmp.gt.f32.partialorder %v128, 0.0
  %vm137 = vcmp.gt.f32.partialorder %v129, 0.0
  %vm138 = vcmp.gt.f32.partialorder %v130, 0.0
  %vm139 = vcmp.gt.f32.partialorder %v131, 0.0
  %vm140 = vcmp.gt.f32.partialorder %v132, 0.0
  %vm141 = vcmp.gt.f32.partialorder %v133, 0.0
  %v142 = vmul.f32 %v126, 0.2
  %v143 = vmul.f32 %v127, 0.2
  %v144 = vmul.f32 %v128, 0.2
  %v145 = vmul.f32 %v129, 0.2
  %v146 = vmul.f32 %v130, 0.2
  %v147 = vmul.f32 %v131, 0.2
  %v148 = vmul.f32 %v132, 0.2
  %v149 = vmul.f32 %v133, 0.2
  %v150 = vsel %vm134, %v126, %v142
  %v151 = vsel %vm135, %v127, %v143
  %v152 = vsel %vm136, %v128, %v144
  %v153 = vsel %vm137, %v129, %v145
  %v154 = vsel %vm138, %v130, %v146
  %v155 = vsel %vm139, %v131, %v147
  %v156 = vsel %vm140, %v132, %v148
  %v157 = vsel %vm141, %v133, %v149
  %v158 = vpack.c.bf16 %v151, %v150
  %v159 = vpack.c.bf16 %v153, %v152
  %v160 = vpack.c.bf16 %v155, %v154
  %v161 = vpack.c.bf16 %v157, %v156
  %v166 = vunpack.c.l.b16 %v158
  %v167 = vunpack.c.h.b16 %v158
  %v168 = vunpack.c.l.b16 %v159
  %v169 = vunpack.c.h.b16 %v159
  %v170 = vunpack.c.l.b16 %v160
  %v171 = vunpack.c.h.b16 %v160
  %v172 = vunpack.c.l.b16 %v161
  %v173 = vunpack.c.h.b16 %v161
  %v174 = vpack.c.b16 %v166, %v166
  %v175 = vpack.c.b16 %v167, %v167
  %v176 = vpack.c.b16 %v168, %v168
  %v177 = vpack.c.b16 %v169, %v169
  %v178 = vpack.c.b16 %v170, %v170
  %v179 = vpack.c.b16 %v171, %v171
  %v180 = vpack.c.b16 %v172, %v172
  %v181 = vpack.c.b16 %v173, %v173
  %vm190 = vcmask 257024
  %191 = vst.msk [vmem:[%s3] sm:$0xf] %vm190, %v174
  %192 = vst.msk [vmem:[%s3 + $0x4] sm:$0xf] %vm190, %v175
  %193 = vst.msk [vmem:[%s3 + $0x8] sm:$0xf] %vm190, %v176
  %194 = vst.msk [vmem:[%s3 + $0xc] sm:$0xf] %vm190, %v177
  %195 = vst.msk [vmem:[%s3 + $0x10] sm:$0xf] %vm190, %v178
  %196 = vst.msk [vmem:[%s3 + $0x14] sm:$0xf] %vm190, %v179
  %197 = vst.msk [vmem:[%s3 + $0x18] sm:$0xf] %vm190, %v180
  %198 = vst.msk [vmem:[%s3 + $0x1c] sm:$0xf] %vm190, %v181
  // Predicated region
  $region14: #{discriminator_forward.13} parent=0 // pred_check
    _
  $region15: #{discriminator_forward.13} parent=0 // pred_check_branch
    %200 = sbr.rel (0) target = $region17
  $region16: #{discriminator_forward.13} parent=0 // pred_region
    _
  $region17: #{discriminator_forward.13} parent=0 // pred_fallthru
    _
  // Predicated region
  $region18: #{discriminator_forward.13} parent=0 // pred_check
    _
  $region19: #{discriminator_forward.13} parent=0 // pred_check_branch
    %202 = sbr.rel (0) target = $region21
  $region20: #{discriminator_forward.13} parent=0 // pred_region
    _
  $region21: #{discriminator_forward.13} parent=0 // pred_fallthru
    _

</llo_original>
